<compile_context>
chip_gen: v5e
topology: v5e:2x2
jax: 0.10.0
libtpu: 0.0.40
codegen_flags: <defaults>
</compile_context>

<pallas_src>
from functools import partial

import numpy as np
import jax
import jax.numpy as jnp
from jax import lax
from jax.experimental import pallas as pl
from jax.experimental.pallas import tpu as pltpu

CMAX = 8        # channel counts are padded to this inside the kernel
N_LAYERS = 7
KTAPS = 9       # 3x3 conv taps


# ----------------------------------------------------------------------------
# Scale computation (exact port of NetQuantized's static methods)
# ----------------------------------------------------------------------------
def quantize_initial_input(pixels: np.ndarray) -> float:
    max_pixel = float(np.max(pixels))
    min_pixel = abs(float(np.min(pixels)))
    if max_pixel < min_pixel:
        max_pixel = min_pixel
        min_pixel = -1 * min_pixel
    else:
        min_pixel = -1 * max_pixel
    S = (127 - (-128)) / (max_pixel - min_pixel)
    return S


def quantize_activations(activations: np.ndarray, n_w: float,
                         n_initial_input: float, ns) -> float:
    max_act = float(np.max(activations))
    min_act = abs(float(np.min(activations)))
    if max_act < min_act:
        max_act = min_act
        min_act = -1 * min_act
    else:
        min_act = -1 * max_act
    nol = (127 - (-128)) / (max_act - min_act)
    s = 1.0
    for pair in ns:
        for scale in pair:
            s = s * scale
    Sl = nol / (n_initial_input * n_w * s)
    return Sl


# ----------------------------------------------------------------------------
# Fused Pallas kernel: whole 7-layer network, whole batch, single invocation
# ----------------------------------------------------------------------------
def _net_kernel(scales_ref, x_ref, w_ref, mask_ref, o_ref, *, H, W, out_channels):
    # TODO(synk): the PyTorch forward_pre_hook assertions (inputs must be
    # int-valued in [-128,127], raising Python exceptions) have no in-kernel
    # equivalent; they hold by construction and are checked host-side on the
    # final output.
    NM = x_ref.shape[-1]                       # N * H * W (lane-folded batch)

    # Initial input requantization: floor(x * round(S*2^16)/2^16), clamp.
    act = jnp.clip(jnp.floor(x_ref[...] * scales_ref[0]), -128.0, 127.0)

    for l in range(N_LAYERS):
        # ---- in-kernel im2col: 9 rolled + masked copies of `act`, kept as a
        #      vreg value (no VMEM patch scratch).  Masks are precomputed
        #      host-side per-image, so the circular roll cannot bleed pixels
        #      across image or spatial boundaries. ---------------------------
        slabs = []
        for t in range(KTAPS):
            dh, dw = t // 3 - 1, t % 3 - 1
            off = dh * W + dw
            if off == 0:
                slabs.append(act)              # center tap: never out of bounds
            else:
                rolled = pltpu.roll(act, shift=(-off) % NM, axis=1)
                slabs.append(rolled * mask_ref[t * CMAX:(t + 1) * CMAX, :])
        patch = jnp.concatenate(slabs, axis=0)                  # [72, NM]

        # ---- conv as one lane-dense MXU matmul: [8, 72] @ [72, NM] ----------
        acc = jnp.dot(w_ref[l], patch,
                      preferred_element_type=jnp.float32)       # [CMAX, NM]
        if l < N_LAYERS - 1:
            acc = jnp.maximum(acc, 0.0)                         # fused ReLU 1..6

        # ---- fixed-point requantization + clamp to int8 range ---------------
        act = jnp.clip(jnp.floor(acc * scales_ref[l + 1]), -128.0, 127.0)

    # Write only the real output channels.
    o_ref[...] = act[:out_channels]


def net_quantized_forward(x, w_flat, masks, scale_mults, out_channels):
    """x: [N, Cin, H, W] f32, w_flat: [7, CMAX, 9*CMAX] f32,
    masks: [9*CMAX, N*H*W] f32 (0/1), scale_mults: [8] f32."""
    N, C, H, W = x.shape
    NM = N * H * W

    # Lane-fold the batch: [C, N*H*W]; zero-pad channels to CMAX.
    xf = jnp.transpose(x, (1, 0, 2, 3)).reshape(C, NM)
    if C < CMAX:
        xf = jnp.pad(xf, ((0, CMAX - C), (0, 0)))

    out = pl.pallas_call(
        partial(_net_kernel, H=H, W=W, out_channels=out_channels),
        out_shape=jax.ShapeDtypeStruct((out_channels, NM), jnp.float32),
        in_specs=[
            pl.BlockSpec(memory_space=pltpu.MemorySpace.SMEM),   # requant scales
            pl.BlockSpec(memory_space=pltpu.MemorySpace.VMEM),   # activations
            pl.BlockSpec(memory_space=pltpu.MemorySpace.VMEM),   # flattened weights
            pl.BlockSpec(memory_space=pltpu.MemorySpace.VMEM),   # tap masks
        ],
        out_specs=pl.BlockSpec(memory_space=pltpu.MemorySpace.VMEM),
    )(scale_mults, xf, w_flat, masks)

    return out.reshape(out_channels, N, H, W).transpose(1, 0, 2, 3)


# ----------------------------------------------------------------------------
# Host-side precomputation of the 3x3 zero-padding masks (per image)
# ----------------------------------------------------------------------------
def build_tap_masks(N, H, W):
    HW = H * W
    NM = N * HW
    mi = np.arange(NM) % HW                    # per-image flat index
    hh = mi // W
    ww = mi % W
    mask = np.zeros((KTAPS * CMAX, NM), np.float32)
    for t in range(KTAPS):
        dh, dw = t // 3 - 1, t % 3 - 1
        valid = ((hh + dh >= 0) & (hh + dh < H) &
                 (ww + dw >= 0) & (ww + dw < W))
        mask[t * CMAX:(t + 1) * CMAX, :] = valid.astype(np.float32)
    return jnp.asarray(mask)


# ----------------------------------------------------------------------------
# Model setup (deterministic synthetic quantized weights and scales)
# ----------------------------------------------------------------------------
def build_net_quantized(key):
    # 7 conv layers: channels 4 -> 8 -> 8 -> 8 -> 8 -> 8 -> 8 -> 4, 3x3, pad 1,
    # bias=False (weights-only quantization).  Layers 1..6 have ReLU.
    channels = [4, 8, 8, 8, 8, 8, 8, 4]
    keys = jax.random.split(key, 3 * N_LAYERS + 1)

    weights, weight_scales, act_samples = [], [], []
    for i in range(N_LAYERS):
        cin, cout = channels[i], channels[i + 1]
        w = jnp.round(jax.random.uniform(keys[3 * i], (cout, cin, 3, 3),
                                         minval=-16.0, maxval=16.0)).astype(jnp.float32)
        weights.append(w)
        weight_scales.append(float(jax.random.uniform(keys[3 * i + 1], (),
                                                      minval=0.05, maxval=0.5)))
        act_samples.append(np.asarray(
            jax.random.normal(keys[3 * i + 2], (256,)) * (50.0 * (i + 1))))
    input_activations = np.asarray(
        jax.random.uniform(keys[-1], (512,), minval=-3.0, maxval=3.0))

    input_scale = quantize_initial_input(input_activations)
    preceding, output_scales = [], []
    for i in range(N_LAYERS):
        s_out = quantize_activations(act_samples[i], weight_scales[i],
                                     input_scale, preceding)
        output_scales.append(s_out)
        preceding.append((weight_scales[i], s_out))

    # Fixed-point multipliers: round(S*2^16) * 2^-16 is bit-identical in f32 to
    # (x * round(S*2^16)) / 2^16 only while round(S*2^16) fits in 24 bits.
    def fp_mult(s):
        fixed = np.round(s * 2.0 ** 16)
        assert abs(fixed) < 2.0 ** 24, "requant multiplier exceeds 24 bits"
        return np.float32(fixed) / np.float32(2.0 ** 16)
    mults = jnp.asarray([fp_mult(input_scale)] + [fp_mult(s) for s in output_scales],
                        dtype=jnp.float32)

    # Flatten weights to the in-kernel patch layout:
    # w_flat[l, co, (kh*3+kw)*CMAX + ci] = w_l[co, ci, kh, kw]; unused rows = 0.
    w_flat = np.zeros((N_LAYERS, CMAX, KTAPS * CMAX), np.float32)
    for l, w in enumerate(weights):
        cout, cin = w.shape[0], w.shape[1]
        wp = np.zeros((CMAX, 3, 3, CMAX), np.float32)
        wp[:cout, :, :, :cin] = np.transpose(np.asarray(w), (0, 2, 3, 1))
        w_flat[l] = wp.reshape(CMAX, KTAPS * CMAX)

    return weights, jnp.asarray(w_flat), mults, channels[-1]


# ----------------------------------------------------------------------------
# Pure-JAX reference (same f32 arithmetic; exact since all operands are small
# integers), used to verify the fused kernel bit-exactly.
# ----------------------------------------------------------------------------
def reference_forward(x, weights, mults):
    y = jnp.clip(jnp.floor(x * mults[0]), -128.0, 127.0)
    for i, w in enumerate(weights):
        y = lax.conv_general_dilated(
            y, w, window_strides=(1, 1), padding=((1, 1), (1, 1)),
            dimension_numbers=("NCHW", "OIHW", "NCHW"),
            preferred_element_type=jnp.float32,
            precision=lax.Precision.HIGHEST)
        if i < N_LAYERS - 1:
            y = jnp.maximum(y, 0.0)
        y = jnp.clip(jnp.floor(y * mults[i + 1]), -128.0, 127.0)
    return y


# ----------------------------------------------------------------------------
if __name__ == "__main__":
    key = jax.random.PRNGKey(0)
    k_params, k_x = jax.random.split(key)

    weights, w_flat, scale_mults, out_channels = build_net_quantized(k_params)

    # Input image batch, NCHW (PyTorch convention): [2, 4, 16, 16]
    x = jax.random.uniform(k_x, (2, 4, 16, 16), minval=-3.0, maxval=3.0,
                           dtype=jnp.float32)
    N, C, H, W = x.shape
    masks = build_tap_masks(N, H, W)

    fwd = jax.jit(partial(net_quantized_forward, out_channels=out_channels))
    out = jax.block_until_ready(fwd(x, w_flat, masks, scale_mults))

    assert out.shape == (2, out_channels, 16, 16)
    assert bool(jnp.all(out >= -128.0)) and bool(jnp.all(out <= 127.0))
    assert bool(jnp.all(out == jnp.round(out)))        # integer-valued outputs

    ref = jax.block_until_ready(reference_forward(x, weights, scale_mults))
    max_diff = float(jnp.max(jnp.abs(out - ref)))
    assert bool(jnp.all(out == ref)), f"Pallas != JAX reference (max diff {max_diff})"

    print("KERNEL_OK")
</pallas_src>

<mosaic_0001>
module attributes {stable_mosaic.version = 11 : i64} {
  func.func @_net_kernel(%arg0: memref<8xf32, #tpu.memory_space<smem>>, %arg1: memref<8x512xf32, #tpu.memory_space<vmem>>, %arg2: memref<7x8x72xf32, #tpu.memory_space<vmem>>, %arg3: memref<72x512xf32, #tpu.memory_space<vmem>>, %arg4: memref<4x512xf32, #tpu.memory_space<vmem>>) attributes {dimension_semantics = [], scalar_prefetch = 0 : i64, scratch_operands = 0 : i64, tpu.core_type = #tpu.core_type<tc>} {
    %c0 = arith.constant 0 : index
    %c0_0 = arith.constant 0 : index
    %0 = vector.load %arg1[%c0, %c0_0] : memref<8x512xf32, #tpu.memory_space<vmem>>, vector<8x512xf32>
    %c0_1 = arith.constant 0 : index
    %1 = memref.load %arg0[%c0_1] : memref<8xf32, #tpu.memory_space<smem>>
    %2 = vector.broadcast %1 : f32 to vector<8x512xf32>
    %3 = arith.mulf %0, %2 : vector<8x512xf32>
    %4 = math.floor %3 : vector<8x512xf32>
    %cst = arith.constant -1.280000e+02 : f32
    %cst_2 = arith.constant 1.270000e+02 : f32
    %5 = vector.broadcast %cst : f32 to vector<8x512xf32>
    %6 = arith.maximumf %5, %4 : vector<8x512xf32>
    %7 = vector.broadcast %cst_2 : f32 to vector<8x512xf32>
    %8 = arith.minimumf %7, %6 : vector<8x512xf32>
    %c17_i32 = arith.constant 17 : i32
    %9 = tpu.dynamic_rotate %8 by %c17_i32 dim 1 : vector<8x512xf32>, i32 -> vector<8x512xf32>
    %c0_3 = arith.constant 0 : index
    %c0_4 = arith.constant 0 : index
    %10 = vector.load %arg3[%c0_3, %c0_4] : memref<72x512xf32, #tpu.memory_space<vmem>>, vector<8x512xf32>
    %11 = arith.mulf %9, %10 : vector<8x512xf32>
    %c16_i32 = arith.constant 16 : i32
    %12 = tpu.dynamic_rotate %8 by %c16_i32 dim 1 : vector<8x512xf32>, i32 -> vector<8x512xf32>
    %c8 = arith.constant 8 : index
    %c0_5 = arith.constant 0 : index
    %13 = vector.load %arg3[%c8, %c0_5] : memref<72x512xf32, #tpu.memory_space<vmem>>, vector<8x512xf32>
    %14 = arith.mulf %12, %13 : vector<8x512xf32>
    %c15_i32 = arith.constant 15 : i32
    %15 = tpu.dynamic_rotate %8 by %c15_i32 dim 1 : vector<8x512xf32>, i32 -> vector<8x512xf32>
    %c16 = arith.constant 16 : index
    %c0_6 = arith.constant 0 : index
    %16 = vector.load %arg3[%c16, %c0_6] : memref<72x512xf32, #tpu.memory_space<vmem>>, vector<8x512xf32>
    %17 = arith.mulf %15, %16 : vector<8x512xf32>
    %c1_i32 = arith.constant 1 : i32
    %18 = tpu.dynamic_rotate %8 by %c1_i32 dim 1 : vector<8x512xf32>, i32 -> vector<8x512xf32>
    %c24 = arith.constant 24 : index
    %c0_7 = arith.constant 0 : index
    %19 = vector.load %arg3[%c24, %c0_7] : memref<72x512xf32, #tpu.memory_space<vmem>>, vector<8x512xf32>
    %20 = arith.mulf %18, %19 : vector<8x512xf32>
    %c511_i32 = arith.constant 511 : i32
    %21 = tpu.dynamic_rotate %8 by %c511_i32 dim 1 : vector<8x512xf32>, i32 -> vector<8x512xf32>
    %c40 = arith.constant 40 : index
    %c0_8 = arith.constant 0 : index
    %22 = vector.load %arg3[%c40, %c0_8] : memref<72x512xf32, #tpu.memory_space<vmem>>, vector<8x512xf32>
    %23 = arith.mulf %21, %22 : vector<8x512xf32>
    %c497_i32 = arith.constant 497 : i32
    %24 = tpu.dynamic_rotate %8 by %c497_i32 dim 1 : vector<8x512xf32>, i32 -> vector<8x512xf32>
    %c48 = arith.constant 48 : index
    %c0_9 = arith.constant 0 : index
    %25 = vector.load %arg3[%c48, %c0_9] : memref<72x512xf32, #tpu.memory_space<vmem>>, vector<8x512xf32>
    %26 = arith.mulf %24, %25 : vector<8x512xf32>
    %c496_i32 = arith.constant 496 : i32
    %27 = tpu.dynamic_rotate %8 by %c496_i32 dim 1 : vector<8x512xf32>, i32 -> vector<8x512xf32>
    %c56 = arith.constant 56 : index
    %c0_10 = arith.constant 0 : index
    %28 = vector.load %arg3[%c56, %c0_10] : memref<72x512xf32, #tpu.memory_space<vmem>>, vector<8x512xf32>
    %29 = arith.mulf %27, %28 : vector<8x512xf32>
    %c495_i32 = arith.constant 495 : i32
    %30 = tpu.dynamic_rotate %8 by %c495_i32 dim 1 : vector<8x512xf32>, i32 -> vector<8x512xf32>
    %c64 = arith.constant 64 : index
    %c0_11 = arith.constant 0 : index
    %31 = vector.load %arg3[%c64, %c0_11] : memref<72x512xf32, #tpu.memory_space<vmem>>, vector<8x512xf32>
    %32 = arith.mulf %30, %31 : vector<8x512xf32>
    %33 = tpu.concatenate %11, %14, %17, %20, %8, %23, %26, %29, %32 in 0 : vector<8x512xf32>, vector<8x512xf32>, vector<8x512xf32>, vector<8x512xf32>, vector<8x512xf32>, vector<8x512xf32>, vector<8x512xf32>, vector<8x512xf32>, vector<8x512xf32> -> vector<72x512xf32>
    %c0_12 = arith.constant 0 : index
    %c0_13 = arith.constant 0 : index
    %c0_14 = arith.constant 0 : index
    %34 = vector.load %arg2[%c0_12, %c0_13, %c0_14] : memref<7x8x72xf32, #tpu.memory_space<vmem>>, vector<1x8x72xf32>
    %35 = vector.shape_cast %34 : vector<1x8x72xf32> to vector<8x72xf32>
    %cst_15 = arith.constant dense<0.000000e+00> : vector<8x512xf32>
    %36 = tpu.matmul %35, %33, %cst_15 {dimension_numbers = #tpu.dot_dimension_numbers<[1], [0], [0], [1], [0, 0, 1, 1], [], []>} : vector<8x72xf32>, vector<72x512xf32>, vector<8x512xf32> -> vector<8x512xf32>
    %cst_16 = arith.constant 0.000000e+00 : f32
    %37 = vector.broadcast %cst_16 : f32 to vector<8x512xf32>
    %38 = arith.maximumf %36, %37 : vector<8x512xf32>
    %c1 = arith.constant 1 : index
    %39 = memref.load %arg0[%c1] : memref<8xf32, #tpu.memory_space<smem>>
    %40 = vector.broadcast %39 : f32 to vector<8x512xf32>
    %41 = arith.mulf %38, %40 : vector<8x512xf32>
    %42 = math.floor %41 : vector<8x512xf32>
    %cst_17 = arith.constant -1.280000e+02 : f32
    %cst_18 = arith.constant 1.270000e+02 : f32
    %43 = vector.broadcast %cst_17 : f32 to vector<8x512xf32>
    %44 = arith.maximumf %43, %42 : vector<8x512xf32>
    %45 = vector.broadcast %cst_18 : f32 to vector<8x512xf32>
    %46 = arith.minimumf %45, %44 : vector<8x512xf32>
    %c17_i32_19 = arith.constant 17 : i32
    %47 = tpu.dynamic_rotate %46 by %c17_i32_19 dim 1 : vector<8x512xf32>, i32 -> vector<8x512xf32>
    %c0_20 = arith.constant 0 : index
    %c0_21 = arith.constant 0 : index
    %48 = vector.load %arg3[%c0_20, %c0_21] : memref<72x512xf32, #tpu.memory_space<vmem>>, vector<8x512xf32>
    %49 = arith.mulf %47, %48 : vector<8x512xf32>
    %c16_i32_22 = arith.constant 16 : i32
    %50 = tpu.dynamic_rotate %46 by %c16_i32_22 dim 1 : vector<8x512xf32>, i32 -> vector<8x512xf32>
    %c8_23 = arith.constant 8 : index
    %c0_24 = arith.constant 0 : index
    %51 = vector.load %arg3[%c8_23, %c0_24] : memref<72x512xf32, #tpu.memory_space<vmem>>, vector<8x512xf32>
    %52 = arith.mulf %50, %51 : vector<8x512xf32>
    %c15_i32_25 = arith.constant 15 : i32
    %53 = tpu.dynamic_rotate %46 by %c15_i32_25 dim 1 : vector<8x512xf32>, i32 -> vector<8x512xf32>
    %c16_26 = arith.constant 16 : index
    %c0_27 = arith.constant 0 : index
    %54 = vector.load %arg3[%c16_26, %c0_27] : memref<72x512xf32, #tpu.memory_space<vmem>>, vector<8x512xf32>
    %55 = arith.mulf %53, %54 : vector<8x512xf32>
    %c1_i32_28 = arith.constant 1 : i32
    %56 = tpu.dynamic_rotate %46 by %c1_i32_28 dim 1 : vector<8x512xf32>, i32 -> vector<8x512xf32>
    %c24_29 = arith.constant 24 : index
    %c0_30 = arith.constant 0 : index
    %57 = vector.load %arg3[%c24_29, %c0_30] : memref<72x512xf32, #tpu.memory_space<vmem>>, vector<8x512xf32>
    %58 = arith.mulf %56, %57 : vector<8x512xf32>
    %c511_i32_31 = arith.constant 511 : i32
    %59 = tpu.dynamic_rotate %46 by %c511_i32_31 dim 1 : vector<8x512xf32>, i32 -> vector<8x512xf32>
    %c40_32 = arith.constant 40 : index
    %c0_33 = arith.constant 0 : index
    %60 = vector.load %arg3[%c40_32, %c0_33] : memref<72x512xf32, #tpu.memory_space<vmem>>, vector<8x512xf32>
    %61 = arith.mulf %59, %60 : vector<8x512xf32>
    %c497_i32_34 = arith.constant 497 : i32
    %62 = tpu.dynamic_rotate %46 by %c497_i32_34 dim 1 : vector<8x512xf32>, i32 -> vector<8x512xf32>
    %c48_35 = arith.constant 48 : index
    %c0_36 = arith.constant 0 : index
    %63 = vector.load %arg3[%c48_35, %c0_36] : memref<72x512xf32, #tpu.memory_space<vmem>>, vector<8x512xf32>
    %64 = arith.mulf %62, %63 : vector<8x512xf32>
    %c496_i32_37 = arith.constant 496 : i32
    %65 = tpu.dynamic_rotate %46 by %c496_i32_37 dim 1 : vector<8x512xf32>, i32 -> vector<8x512xf32>
    %c56_38 = arith.constant 56 : index
    %c0_39 = arith.constant 0 : index
    %66 = vector.load %arg3[%c56_38, %c0_39] : memref<72x512xf32, #tpu.memory_space<vmem>>, vector<8x512xf32>
    %67 = arith.mulf %65, %66 : vector<8x512xf32>
    %c495_i32_40 = arith.constant 495 : i32
    %68 = tpu.dynamic_rotate %46 by %c495_i32_40 dim 1 : vector<8x512xf32>, i32 -> vector<8x512xf32>
    %c64_41 = arith.constant 64 : index
    %c0_42 = arith.constant 0 : index
    %69 = vector.load %arg3[%c64_41, %c0_42] : memref<72x512xf32, #tpu.memory_space<vmem>>, vector<8x512xf32>
    %70 = arith.mulf %68, %69 : vector<8x512xf32>
    %71 = tpu.concatenate %49, %52, %55, %58, %46, %61, %64, %67, %70 in 0 : vector<8x512xf32>, vector<8x512xf32>, vector<8x512xf32>, vector<8x512xf32>, vector<8x512xf32>, vector<8x512xf32>, vector<8x512xf32>, vector<8x512xf32>, vector<8x512xf32> -> vector<72x512xf32>
    %c1_43 = arith.constant 1 : index
    %c0_44 = arith.constant 0 : index
    %c0_45 = arith.constant 0 : index
    %72 = vector.load %arg2[%c1_43, %c0_44, %c0_45] : memref<7x8x72xf32, #tpu.memory_space<vmem>>, vector<1x8x72xf32>
    %73 = vector.shape_cast %72 : vector<1x8x72xf32> to vector<8x72xf32>
    %cst_46 = arith.constant dense<0.000000e+00> : vector<8x512xf32>
    %74 = tpu.matmul %73, %71, %cst_46 {dimension_numbers = #tpu.dot_dimension_numbers<[1], [0], [0], [1], [0, 0, 1, 1], [], []>} : vector<8x72xf32>, vector<72x512xf32>, vector<8x512xf32> -> vector<8x512xf32>
    %cst_47 = arith.constant 0.000000e+00 : f32
    %75 = vector.broadcast %cst_47 : f32 to vector<8x512xf32>
    %76 = arith.maximumf %74, %75 : vector<8x512xf32>
    %c2 = arith.constant 2 : index
    %77 = memref.load %arg0[%c2] : memref<8xf32, #tpu.memory_space<smem>>
    %78 = vector.broadcast %77 : f32 to vector<8x512xf32>
    %79 = arith.mulf %76, %78 : vector<8x512xf32>
    %80 = math.floor %79 : vector<8x512xf32>
    %cst_48 = arith.constant -1.280000e+02 : f32
    %cst_49 = arith.constant 1.270000e+02 : f32
    %81 = vector.broadcast %cst_48 : f32 to vector<8x512xf32>
    %82 = arith.maximumf %81, %80 : vector<8x512xf32>
    %83 = vector.broadcast %cst_49 : f32 to vector<8x512xf32>
    %84 = arith.minimumf %83, %82 : vector<8x512xf32>
    %c17_i32_50 = arith.constant 17 : i32
    %85 = tpu.dynamic_rotate %84 by %c17_i32_50 dim 1 : vector<8x512xf32>, i32 -> vector<8x512xf32>
    %c0_51 = arith.constant 0 : index
    %c0_52 = arith.constant 0 : index
    %86 = vector.load %arg3[%c0_51, %c0_52] : memref<72x512xf32, #tpu.memory_space<vmem>>, vector<8x512xf32>
    %87 = arith.mulf %85, %86 : vector<8x512xf32>
    %c16_i32_53 = arith.constant 16 : i32
    %88 = tpu.dynamic_rotate %84 by %c16_i32_53 dim 1 : vector<8x512xf32>, i32 -> vector<8x512xf32>
    %c8_54 = arith.constant 8 : index
    %c0_55 = arith.constant 0 : index
    %89 = vector.load %arg3[%c8_54, %c0_55] : memref<72x512xf32, #tpu.memory_space<vmem>>, vector<8x512xf32>
    %90 = arith.mulf %88, %89 : vector<8x512xf32>
    %c15_i32_56 = arith.constant 15 : i32
    %91 = tpu.dynamic_rotate %84 by %c15_i32_56 dim 1 : vector<8x512xf32>, i32 -> vector<8x512xf32>
    %c16_57 = arith.constant 16 : index
    %c0_58 = arith.constant 0 : index
    %92 = vector.load %arg3[%c16_57, %c0_58] : memref<72x512xf32, #tpu.memory_space<vmem>>, vector<8x512xf32>
    %93 = arith.mulf %91, %92 : vector<8x512xf32>
    %c1_i32_59 = arith.constant 1 : i32
    %94 = tpu.dynamic_rotate %84 by %c1_i32_59 dim 1 : vector<8x512xf32>, i32 -> vector<8x512xf32>
    %c24_60 = arith.constant 24 : index
    %c0_61 = arith.constant 0 : index
    %95 = vector.load %arg3[%c24_60, %c0_61] : memref<72x512xf32, #tpu.memory_space<vmem>>, vector<8x512xf32>
    %96 = arith.mulf %94, %95 : vector<8x512xf32>
    %c511_i32_62 = arith.constant 511 : i32
    %97 = tpu.dynamic_rotate %84 by %c511_i32_62 dim 1 : vector<8x512xf32>, i32 -> vector<8x512xf32>
    %c40_63 = arith.constant 40 : index
    %c0_64 = arith.constant 0 : index
    %98 = vector.load %arg3[%c40_63, %c0_64] : memref<72x512xf32, #tpu.memory_space<vmem>>, vector<8x512xf32>
    %99 = arith.mulf %97, %98 : vector<8x512xf32>
    %c497_i32_65 = arith.constant 497 : i32
    %100 = tpu.dynamic_rotate %84 by %c497_i32_65 dim 1 : vector<8x512xf32>, i32 -> vector<8x512xf32>
    %c48_66 = arith.constant 48 : index
    %c0_67 = arith.constant 0 : index
    %101 = vector.load %arg3[%c48_66, %c0_67] : memref<72x512xf32, #tpu.memory_space<vmem>>, vector<8x512xf32>
    %102 = arith.mulf %100, %101 : vector<8x512xf32>
    %c496_i32_68 = arith.constant 496 : i32
    %103 = tpu.dynamic_rotate %84 by %c496_i32_68 dim 1 : vector<8x512xf32>, i32 -> vector<8x512xf32>
    %c56_69 = arith.constant 56 : index
    %c0_70 = arith.constant 0 : index
    %104 = vector.load %arg3[%c56_69, %c0_70] : memref<72x512xf32, #tpu.memory_space<vmem>>, vector<8x512xf32>
    %105 = arith.mulf %103, %104 : vector<8x512xf32>
    %c495_i32_71 = arith.constant 495 : i32
    %106 = tpu.dynamic_rotate %84 by %c495_i32_71 dim 1 : vector<8x512xf32>, i32 -> vector<8x512xf32>
    %c64_72 = arith.constant 64 : index
    %c0_73 = arith.constant 0 : index
    %107 = vector.load %arg3[%c64_72, %c0_73] : memref<72x512xf32, #tpu.memory_space<vmem>>, vector<8x512xf32>
    %108 = arith.mulf %106, %107 : vector<8x512xf32>
    %109 = tpu.concatenate %87, %90, %93, %96, %84, %99, %102, %105, %108 in 0 : vector<8x512xf32>, vector<8x512xf32>, vector<8x512xf32>, vector<8x512xf32>, vector<8x512xf32>, vector<8x512xf32>, vector<8x512xf32>, vector<8x512xf32>, vector<8x512xf32> -> vector<72x512xf32>
    %c2_74 = arith.constant 2 : index
    %c0_75 = arith.constant 0 : index
    %c0_76 = arith.constant 0 : index
    %110 = vector.load %arg2[%c2_74, %c0_75, %c0_76] : memref<7x8x72xf32, #tpu.memory_space<vmem>>, vector<1x8x72xf32>
    %111 = vector.shape_cast %110 : vector<1x8x72xf32> to vector<8x72xf32>
    %cst_77 = arith.constant dense<0.000000e+00> : vector<8x512xf32>
    %112 = tpu.matmul %111, %109, %cst_77 {dimension_numbers = #tpu.dot_dimension_numbers<[1], [0], [0], [1], [0, 0, 1, 1], [], []>} : vector<8x72xf32>, vector<72x512xf32>, vector<8x512xf32> -> vector<8x512xf32>
    %cst_78 = arith.constant 0.000000e+00 : f32
    %113 = vector.broadcast %cst_78 : f32 to vector<8x512xf32>
    %114 = arith.maximumf %112, %113 : vector<8x512xf32>
    %c3 = arith.constant 3 : index
    %115 = memref.load %arg0[%c3] : memref<8xf32, #tpu.memory_space<smem>>
    %116 = vector.broadcast %115 : f32 to vector<8x512xf32>
    %117 = arith.mulf %114, %116 : vector<8x512xf32>
    %118 = math.floor %117 : vector<8x512xf32>
    %cst_79 = arith.constant -1.280000e+02 : f32
    %cst_80 = arith.constant 1.270000e+02 : f32
    %119 = vector.broadcast %cst_79 : f32 to vector<8x512xf32>
    %120 = arith.maximumf %119, %118 : vector<8x512xf32>
    %121 = vector.broadcast %cst_80 : f32 to vector<8x512xf32>
    %122 = arith.minimumf %121, %120 : vector<8x512xf32>
    %c17_i32_81 = arith.constant 17 : i32
    %123 = tpu.dynamic_rotate %122 by %c17_i32_81 dim 1 : vector<8x512xf32>, i32 -> vector<8x512xf32>
    %c0_82 = arith.constant 0 : index
    %c0_83 = arith.constant 0 : index
    %124 = vector.load %arg3[%c0_82, %c0_83] : memref<72x512xf32, #tpu.memory_space<vmem>>, vector<8x512xf32>
    %125 = arith.mulf %123, %124 : vector<8x512xf32>
    %c16_i32_84 = arith.constant 16 : i32
    %126 = tpu.dynamic_rotate %122 by %c16_i32_84 dim 1 : vector<8x512xf32>, i32 -> vector<8x512xf32>
    %c8_85 = arith.constant 8 : index
    %c0_86 = arith.constant 0 : index
    %127 = vector.load %arg3[%c8_85, %c0_86] : memref<72x512xf32, #tpu.memory_space<vmem>>, vector<8x512xf32>
    %128 = arith.mulf %126, %127 : vector<8x512xf32>
    %c15_i32_87 = arith.constant 15 : i32
    %129 = tpu.dynamic_rotate %122 by %c15_i32_87 dim 1 : vector<8x512xf32>, i32 -> vector<8x512xf32>
    %c16_88 = arith.constant 16 : index
    %c0_89 = arith.constant 0 : index
    %130 = vector.load %arg3[%c16_88, %c0_89] : memref<72x512xf32, #tpu.memory_space<vmem>>, vector<8x512xf32>
    %131 = arith.mulf %129, %130 : vector<8x512xf32>
    %c1_i32_90 = arith.constant 1 : i32
    %132 = tpu.dynamic_rotate %122 by %c1_i32_90 dim 1 : vector<8x512xf32>, i32 -> vector<8x512xf32>
    %c24_91 = arith.constant 24 : index
    %c0_92 = arith.constant 0 : index
    %133 = vector.load %arg3[%c24_91, %c0_92] : memref<72x512xf32, #tpu.memory_space<vmem>>, vector<8x512xf32>
    %134 = arith.mulf %132, %133 : vector<8x512xf32>
    %c511_i32_93 = arith.constant 511 : i32
    %135 = tpu.dynamic_rotate %122 by %c511_i32_93 dim 1 : vector<8x512xf32>, i32 -> vector<8x512xf32>
    %c40_94 = arith.constant 40 : index
    %c0_95 = arith.constant 0 : index
    %136 = vector.load %arg3[%c40_94, %c0_95] : memref<72x512xf32, #tpu.memory_space<vmem>>, vector<8x512xf32>
    %137 = arith.mulf %135, %136 : vector<8x512xf32>
    %c497_i32_96 = arith.constant 497 : i32
    %138 = tpu.dynamic_rotate %122 by %c497_i32_96 dim 1 : vector<8x512xf32>, i32 -> vector<8x512xf32>
    %c48_97 = arith.constant 48 : index
    %c0_98 = arith.constant 0 : index
    %139 = vector.load %arg3[%c48_97, %c0_98] : memref<72x512xf32, #tpu.memory_space<vmem>>, vector<8x512xf32>
    %140 = arith.mulf %138, %139 : vector<8x512xf32>
    %c496_i32_99 = arith.constant 496 : i32
    %141 = tpu.dynamic_rotate %122 by %c496_i32_99 dim 1 : vector<8x512xf32>, i32 -> vector<8x512xf32>
    %c56_100 = arith.constant 56 : index
    %c0_101 = arith.constant 0 : index
    %142 = vector.load %arg3[%c56_100, %c0_101] : memref<72x512xf32, #tpu.memory_space<vmem>>, vector<8x512xf32>
    %143 = arith.mulf %141, %142 : vector<8x512xf32>
    %c495_i32_102 = arith.constant 495 : i32
    %144 = tpu.dynamic_rotate %122 by %c495_i32_102 dim 1 : vector<8x512xf32>, i32 -> vector<8x512xf32>
    %c64_103 = arith.constant 64 : index
    %c0_104 = arith.constant 0 : index
    %145 = vector.load %arg3[%c64_103, %c0_104] : memref<72x512xf32, #tpu.memory_space<vmem>>, vector<8x512xf32>
    %146 = arith.mulf %144, %145 : vector<8x512xf32>
    %147 = tpu.concatenate %125, %128, %131, %134, %122, %137, %140, %143, %146 in 0 : vector<8x512xf32>, vector<8x512xf32>, vector<8x512xf32>, vector<8x512xf32>, vector<8x512xf32>, vector<8x512xf32>, vector<8x512xf32>, vector<8x512xf32>, vector<8x512xf32> -> vector<72x512xf32>
    %c3_105 = arith.constant 3 : index
    %c0_106 = arith.constant 0 : index
    %c0_107 = arith.constant 0 : index
    %148 = vector.load %arg2[%c3_105, %c0_106, %c0_107] : memref<7x8x72xf32, #tpu.memory_space<vmem>>, vector<1x8x72xf32>
    %149 = vector.shape_cast %148 : vector<1x8x72xf32> to vector<8x72xf32>
    %cst_108 = arith.constant dense<0.000000e+00> : vector<8x512xf32>
    %150 = tpu.matmul %149, %147, %cst_108 {dimension_numbers = #tpu.dot_dimension_numbers<[1], [0], [0], [1], [0, 0, 1, 1], [], []>} : vector<8x72xf32>, vector<72x512xf32>, vector<8x512xf32> -> vector<8x512xf32>
    %cst_109 = arith.constant 0.000000e+00 : f32
    %151 = vector.broadcast %cst_109 : f32 to vector<8x512xf32>
    %152 = arith.maximumf %150, %151 : vector<8x512xf32>
    %c4 = arith.constant 4 : index
    %153 = memref.load %arg0[%c4] : memref<8xf32, #tpu.memory_space<smem>>
    %154 = vector.broadcast %153 : f32 to vector<8x512xf32>
    %155 = arith.mulf %152, %154 : vector<8x512xf32>
    %156 = math.floor %155 : vector<8x512xf32>
    %cst_110 = arith.constant -1.280000e+02 : f32
    %cst_111 = arith.constant 1.270000e+02 : f32
    %157 = vector.broadcast %cst_110 : f32 to vector<8x512xf32>
    %158 = arith.maximumf %157, %156 : vector<8x512xf32>
    %159 = vector.broadcast %cst_111 : f32 to vector<8x512xf32>
    %160 = arith.minimumf %159, %158 : vector<8x512xf32>
    %c17_i32_112 = arith.constant 17 : i32
    %161 = tpu.dynamic_rotate %160 by %c17_i32_112 dim 1 : vector<8x512xf32>, i32 -> vector<8x512xf32>
    %c0_113 = arith.constant 0 : index
    %c0_114 = arith.constant 0 : index
    %162 = vector.load %arg3[%c0_113, %c0_114] : memref<72x512xf32, #tpu.memory_space<vmem>>, vector<8x512xf32>
    %163 = arith.mulf %161, %162 : vector<8x512xf32>
    %c16_i32_115 = arith.constant 16 : i32
    %164 = tpu.dynamic_rotate %160 by %c16_i32_115 dim 1 : vector<8x512xf32>, i32 -> vector<8x512xf32>
    %c8_116 = arith.constant 8 : index
    %c0_117 = arith.constant 0 : index
    %165 = vector.load %arg3[%c8_116, %c0_117] : memref<72x512xf32, #tpu.memory_space<vmem>>, vector<8x512xf32>
    %166 = arith.mulf %164, %165 : vector<8x512xf32>
    %c15_i32_118 = arith.constant 15 : i32
    %167 = tpu.dynamic_rotate %160 by %c15_i32_118 dim 1 : vector<8x512xf32>, i32 -> vector<8x512xf32>
    %c16_119 = arith.constant 16 : index
    %c0_120 = arith.constant 0 : index
    %168 = vector.load %arg3[%c16_119, %c0_120] : memref<72x512xf32, #tpu.memory_space<vmem>>, vector<8x512xf32>
    %169 = arith.mulf %167, %168 : vector<8x512xf32>
    %c1_i32_121 = arith.constant 1 : i32
    %170 = tpu.dynamic_rotate %160 by %c1_i32_121 dim 1 : vector<8x512xf32>, i32 -> vector<8x512xf32>
    %c24_122 = arith.constant 24 : index
    %c0_123 = arith.constant 0 : index
    %171 = vector.load %arg3[%c24_122, %c0_123] : memref<72x512xf32, #tpu.memory_space<vmem>>, vector<8x512xf32>
    %172 = arith.mulf %170, %171 : vector<8x512xf32>
    %c511_i32_124 = arith.constant 511 : i32
    %173 = tpu.dynamic_rotate %160 by %c511_i32_124 dim 1 : vector<8x512xf32>, i32 -> vector<8x512xf32>
    %c40_125 = arith.constant 40 : index
    %c0_126 = arith.constant 0 : index
    %174 = vector.load %arg3[%c40_125, %c0_126] : memref<72x512xf32, #tpu.memory_space<vmem>>, vector<8x512xf32>
    %175 = arith.mulf %173, %174 : vector<8x512xf32>
    %c497_i32_127 = arith.constant 497 : i32
    %176 = tpu.dynamic_rotate %160 by %c497_i32_127 dim 1 : vector<8x512xf32>, i32 -> vector<8x512xf32>
    %c48_128 = arith.constant 48 : index
    %c0_129 = arith.constant 0 : index
    %177 = vector.load %arg3[%c48_128, %c0_129] : memref<72x512xf32, #tpu.memory_space<vmem>>, vector<8x512xf32>
    %178 = arith.mulf %176, %177 : vector<8x512xf32>
    %c496_i32_130 = arith.constant 496 : i32
    %179 = tpu.dynamic_rotate %160 by %c496_i32_130 dim 1 : vector<8x512xf32>, i32 -> vector<8x512xf32>
    %c56_131 = arith.constant 56 : index
    %c0_132 = arith.constant 0 : index
    %180 = vector.load %arg3[%c56_131, %c0_132] : memref<72x512xf32, #tpu.memory_space<vmem>>, vector<8x512xf32>
    %181 = arith.mulf %179, %180 : vector<8x512xf32>
    %c495_i32_133 = arith.constant 495 : i32
    %182 = tpu.dynamic_rotate %160 by %c495_i32_133 dim 1 : vector<8x512xf32>, i32 -> vector<8x512xf32>
    %c64_134 = arith.constant 64 : index
    %c0_135 = arith.constant 0 : index
    %183 = vector.load %arg3[%c64_134, %c0_135] : memref<72x512xf32, #tpu.memory_space<vmem>>, vector<8x512xf32>
    %184 = arith.mulf %182, %183 : vector<8x512xf32>
    %185 = tpu.concatenate %163, %166, %169, %172, %160, %175, %178, %181, %184 in 0 : vector<8x512xf32>, vector<8x512xf32>, vector<8x512xf32>, vector<8x512xf32>, vector<8x512xf32>, vector<8x512xf32>, vector<8x512xf32>, vector<8x512xf32>, vector<8x512xf32> -> vector<72x512xf32>
    %c4_136 = arith.constant 4 : index
    %c0_137 = arith.constant 0 : index
    %c0_138 = arith.constant 0 : index
    %186 = vector.load %arg2[%c4_136, %c0_137, %c0_138] : memref<7x8x72xf32, #tpu.memory_space<vmem>>, vector<1x8x72xf32>
    %187 = vector.shape_cast %186 : vector<1x8x72xf32> to vector<8x72xf32>
    %cst_139 = arith.constant dense<0.000000e+00> : vector<8x512xf32>
    %188 = tpu.matmul %187, %185, %cst_139 {dimension_numbers = #tpu.dot_dimension_numbers<[1], [0], [0], [1], [0, 0, 1, 1], [], []>} : vector<8x72xf32>, vector<72x512xf32>, vector<8x512xf32> -> vector<8x512xf32>
    %cst_140 = arith.constant 0.000000e+00 : f32
    %189 = vector.broadcast %cst_140 : f32 to vector<8x512xf32>
    %190 = arith.maximumf %188, %189 : vector<8x512xf32>
    %c5 = arith.constant 5 : index
    %191 = memref.load %arg0[%c5] : memref<8xf32, #tpu.memory_space<smem>>
    %192 = vector.broadcast %191 : f32 to vector<8x512xf32>
    %193 = arith.mulf %190, %192 : vector<8x512xf32>
    %194 = math.floor %193 : vector<8x512xf32>
    %cst_141 = arith.constant -1.280000e+02 : f32
    %cst_142 = arith.constant 1.270000e+02 : f32
    %195 = vector.broadcast %cst_141 : f32 to vector<8x512xf32>
    %196 = arith.maximumf %195, %194 : vector<8x512xf32>
    %197 = vector.broadcast %cst_142 : f32 to vector<8x512xf32>
    %198 = arith.minimumf %197, %196 : vector<8x512xf32>
    %c17_i32_143 = arith.constant 17 : i32
    %199 = tpu.dynamic_rotate %198 by %c17_i32_143 dim 1 : vector<8x512xf32>, i32 -> vector<8x512xf32>
    %c0_144 = arith.constant 0 : index
    %c0_145 = arith.constant 0 : index
    %200 = vector.load %arg3[%c0_144, %c0_145] : memref<72x512xf32, #tpu.memory_space<vmem>>, vector<8x512xf32>
    %201 = arith.mulf %199, %200 : vector<8x512xf32>
    %c16_i32_146 = arith.constant 16 : i32
    %202 = tpu.dynamic_rotate %198 by %c16_i32_146 dim 1 : vector<8x512xf32>, i32 -> vector<8x512xf32>
    %c8_147 = arith.constant 8 : index
    %c0_148 = arith.constant 0 : index
    %203 = vector.load %arg3[%c8_147, %c0_148] : memref<72x512xf32, #tpu.memory_space<vmem>>, vector<8x512xf32>
    %204 = arith.mulf %202, %203 : vector<8x512xf32>
    %c15_i32_149 = arith.constant 15 : i32
    %205 = tpu.dynamic_rotate %198 by %c15_i32_149 dim 1 : vector<8x512xf32>, i32 -> vector<8x512xf32>
    %c16_150 = arith.constant 16 : index
    %c0_151 = arith.constant 0 : index
    %206 = vector.load %arg3[%c16_150, %c0_151] : memref<72x512xf32, #tpu.memory_space<vmem>>, vector<8x512xf32>
    %207 = arith.mulf %205, %206 : vector<8x512xf32>
    %c1_i32_152 = arith.constant 1 : i32
    %208 = tpu.dynamic_rotate %198 by %c1_i32_152 dim 1 : vector<8x512xf32>, i32 -> vector<8x512xf32>
    %c24_153 = arith.constant 24 : index
    %c0_154 = arith.constant 0 : index
    %209 = vector.load %arg3[%c24_153, %c0_154] : memref<72x512xf32, #tpu.memory_space<vmem>>, vector<8x512xf32>
    %210 = arith.mulf %208, %209 : vector<8x512xf32>
    %c511_i32_155 = arith.constant 511 : i32
    %211 = tpu.dynamic_rotate %198 by %c511_i32_155 dim 1 : vector<8x512xf32>, i32 -> vector<8x512xf32>
    %c40_156 = arith.constant 40 : index
    %c0_157 = arith.constant 0 : index
    %212 = vector.load %arg3[%c40_156, %c0_157] : memref<72x512xf32, #tpu.memory_space<vmem>>, vector<8x512xf32>
    %213 = arith.mulf %211, %212 : vector<8x512xf32>
    %c497_i32_158 = arith.constant 497 : i32
    %214 = tpu.dynamic_rotate %198 by %c497_i32_158 dim 1 : vector<8x512xf32>, i32 -> vector<8x512xf32>
    %c48_159 = arith.constant 48 : index
    %c0_160 = arith.constant 0 : index
    %215 = vector.load %arg3[%c48_159, %c0_160] : memref<72x512xf32, #tpu.memory_space<vmem>>, vector<8x512xf32>
    %216 = arith.mulf %214, %215 : vector<8x512xf32>
    %c496_i32_161 = arith.constant 496 : i32
    %217 = tpu.dynamic_rotate %198 by %c496_i32_161 dim 1 : vector<8x512xf32>, i32 -> vector<8x512xf32>
    %c56_162 = arith.constant 56 : index
    %c0_163 = arith.constant 0 : index
    %218 = vector.load %arg3[%c56_162, %c0_163] : memref<72x512xf32, #tpu.memory_space<vmem>>, vector<8x512xf32>
    %219 = arith.mulf %217, %218 : vector<8x512xf32>
    %c495_i32_164 = arith.constant 495 : i32
    %220 = tpu.dynamic_rotate %198 by %c495_i32_164 dim 1 : vector<8x512xf32>, i32 -> vector<8x512xf32>
    %c64_165 = arith.constant 64 : index
    %c0_166 = arith.constant 0 : index
    %221 = vector.load %arg3[%c64_165, %c0_166] : memref<72x512xf32, #tpu.memory_space<vmem>>, vector<8x512xf32>
    %222 = arith.mulf %220, %221 : vector<8x512xf32>
    %223 = tpu.concatenate %201, %204, %207, %210, %198, %213, %216, %219, %222 in 0 : vector<8x512xf32>, vector<8x512xf32>, vector<8x512xf32>, vector<8x512xf32>, vector<8x512xf32>, vector<8x512xf32>, vector<8x512xf32>, vector<8x512xf32>, vector<8x512xf32> -> vector<72x512xf32>
    %c5_167 = arith.constant 5 : index
    %c0_168 = arith.constant 0 : index
    %c0_169 = arith.constant 0 : index
    %224 = vector.load %arg2[%c5_167, %c0_168, %c0_169] : memref<7x8x72xf32, #tpu.memory_space<vmem>>, vector<1x8x72xf32>
    %225 = vector.shape_cast %224 : vector<1x8x72xf32> to vector<8x72xf32>
    %cst_170 = arith.constant dense<0.000000e+00> : vector<8x512xf32>
    %226 = tpu.matmul %225, %223, %cst_170 {dimension_numbers = #tpu.dot_dimension_numbers<[1], [0], [0], [1], [0, 0, 1, 1], [], []>} : vector<8x72xf32>, vector<72x512xf32>, vector<8x512xf32> -> vector<8x512xf32>
    %cst_171 = arith.constant 0.000000e+00 : f32
    %227 = vector.broadcast %cst_171 : f32 to vector<8x512xf32>
    %228 = arith.maximumf %226, %227 : vector<8x512xf32>
    %c6 = arith.constant 6 : index
    %229 = memref.load %arg0[%c6] : memref<8xf32, #tpu.memory_space<smem>>
    %230 = vector.broadcast %229 : f32 to vector<8x512xf32>
    %231 = arith.mulf %228, %230 : vector<8x512xf32>
    %232 = math.floor %231 : vector<8x512xf32>
    %cst_172 = arith.constant -1.280000e+02 : f32
    %cst_173 = arith.constant 1.270000e+02 : f32
    %233 = vector.broadcast %cst_172 : f32 to vector<8x512xf32>
    %234 = arith.maximumf %233, %232 : vector<8x512xf32>
    %235 = vector.broadcast %cst_173 : f32 to vector<8x512xf32>
    %236 = arith.minimumf %235, %234 : vector<8x512xf32>
    %c17_i32_174 = arith.constant 17 : i32
    %237 = tpu.dynamic_rotate %236 by %c17_i32_174 dim 1 : vector<8x512xf32>, i32 -> vector<8x512xf32>
    %c0_175 = arith.constant 0 : index
    %c0_176 = arith.constant 0 : index
    %238 = vector.load %arg3[%c0_175, %c0_176] : memref<72x512xf32, #tpu.memory_space<vmem>>, vector<8x512xf32>
    %239 = arith.mulf %237, %238 : vector<8x512xf32>
    %c16_i32_177 = arith.constant 16 : i32
    %240 = tpu.dynamic_rotate %236 by %c16_i32_177 dim 1 : vector<8x512xf32>, i32 -> vector<8x512xf32>
    %c8_178 = arith.constant 8 : index
    %c0_179 = arith.constant 0 : index
    %241 = vector.load %arg3[%c8_178, %c0_179] : memref<72x512xf32, #tpu.memory_space<vmem>>, vector<8x512xf32>
    %242 = arith.mulf %240, %241 : vector<8x512xf32>
    %c15_i32_180 = arith.constant 15 : i32
    %243 = tpu.dynamic_rotate %236 by %c15_i32_180 dim 1 : vector<8x512xf32>, i32 -> vector<8x512xf32>
    %c16_181 = arith.constant 16 : index
    %c0_182 = arith.constant 0 : index
    %244 = vector.load %arg3[%c16_181, %c0_182] : memref<72x512xf32, #tpu.memory_space<vmem>>, vector<8x512xf32>
    %245 = arith.mulf %243, %244 : vector<8x512xf32>
    %c1_i32_183 = arith.constant 1 : i32
    %246 = tpu.dynamic_rotate %236 by %c1_i32_183 dim 1 : vector<8x512xf32>, i32 -> vector<8x512xf32>
    %c24_184 = arith.constant 24 : index
    %c0_185 = arith.constant 0 : index
    %247 = vector.load %arg3[%c24_184, %c0_185] : memref<72x512xf32, #tpu.memory_space<vmem>>, vector<8x512xf32>
    %248 = arith.mulf %246, %247 : vector<8x512xf32>
    %c511_i32_186 = arith.constant 511 : i32
    %249 = tpu.dynamic_rotate %236 by %c511_i32_186 dim 1 : vector<8x512xf32>, i32 -> vector<8x512xf32>
    %c40_187 = arith.constant 40 : index
    %c0_188 = arith.constant 0 : index
    %250 = vector.load %arg3[%c40_187, %c0_188] : memref<72x512xf32, #tpu.memory_space<vmem>>, vector<8x512xf32>
    %251 = arith.mulf %249, %250 : vector<8x512xf32>
    %c497_i32_189 = arith.constant 497 : i32
    %252 = tpu.dynamic_rotate %236 by %c497_i32_189 dim 1 : vector<8x512xf32>, i32 -> vector<8x512xf32>
    %c48_190 = arith.constant 48 : index
    %c0_191 = arith.constant 0 : index
    %253 = vector.load %arg3[%c48_190, %c0_191] : memref<72x512xf32, #tpu.memory_space<vmem>>, vector<8x512xf32>
    %254 = arith.mulf %252, %253 : vector<8x512xf32>
    %c496_i32_192 = arith.constant 496 : i32
    %255 = tpu.dynamic_rotate %236 by %c496_i32_192 dim 1 : vector<8x512xf32>, i32 -> vector<8x512xf32>
    %c56_193 = arith.constant 56 : index
    %c0_194 = arith.constant 0 : index
    %256 = vector.load %arg3[%c56_193, %c0_194] : memref<72x512xf32, #tpu.memory_space<vmem>>, vector<8x512xf32>
    %257 = arith.mulf %255, %256 : vector<8x512xf32>
    %c495_i32_195 = arith.constant 495 : i32
    %258 = tpu.dynamic_rotate %236 by %c495_i32_195 dim 1 : vector<8x512xf32>, i32 -> vector<8x512xf32>
    %c64_196 = arith.constant 64 : index
    %c0_197 = arith.constant 0 : index
    %259 = vector.load %arg3[%c64_196, %c0_197] : memref<72x512xf32, #tpu.memory_space<vmem>>, vector<8x512xf32>
    %260 = arith.mulf %258, %259 : vector<8x512xf32>
    %261 = tpu.concatenate %239, %242, %245, %248, %236, %251, %254, %257, %260 in 0 : vector<8x512xf32>, vector<8x512xf32>, vector<8x512xf32>, vector<8x512xf32>, vector<8x512xf32>, vector<8x512xf32>, vector<8x512xf32>, vector<8x512xf32>, vector<8x512xf32> -> vector<72x512xf32>
    %c6_198 = arith.constant 6 : index
    %c0_199 = arith.constant 0 : index
    %c0_200 = arith.constant 0 : index
    %262 = vector.load %arg2[%c6_198, %c0_199, %c0_200] : memref<7x8x72xf32, #tpu.memory_space<vmem>>, vector<1x8x72xf32>
    %263 = vector.shape_cast %262 : vector<1x8x72xf32> to vector<8x72xf32>
    %cst_201 = arith.constant dense<0.000000e+00> : vector<8x512xf32>
    %264 = tpu.matmul %263, %261, %cst_201 {dimension_numbers = #tpu.dot_dimension_numbers<[1], [0], [0], [1], [0, 0, 1, 1], [], []>} : vector<8x72xf32>, vector<72x512xf32>, vector<8x512xf32> -> vector<8x512xf32>
    %c7 = arith.constant 7 : index
    %265 = memref.load %arg0[%c7] : memref<8xf32, #tpu.memory_space<smem>>
    %266 = vector.broadcast %265 : f32 to vector<8x512xf32>
    %267 = arith.mulf %264, %266 : vector<8x512xf32>
    %268 = math.floor %267 : vector<8x512xf32>
    %cst_202 = arith.constant -1.280000e+02 : f32
    %cst_203 = arith.constant 1.270000e+02 : f32
    %269 = vector.broadcast %cst_202 : f32 to vector<8x512xf32>
    %270 = arith.maximumf %269, %268 : vector<8x512xf32>
    %271 = vector.broadcast %cst_203 : f32 to vector<8x512xf32>
    %272 = arith.minimumf %271, %270 : vector<8x512xf32>
    %273 = vector.extract_strided_slice %272 {offsets = [0, 0], sizes = [4, 512], strides = [1, 1]} : vector<8x512xf32> to vector<4x512xf32>
    %c0_204 = arith.constant 0 : index
    %c0_205 = arith.constant 0 : index
    %274 = vector.load %arg4[%c0_204, %c0_205] : memref<4x512xf32, #tpu.memory_space<vmem>>, vector<4x512xf32>
    tpu.vector_store %arg4[%c0_204, %c0_205], %273 {strides = array<i32>} : memref<4x512xf32, #tpu.memory_space<vmem>>, vector<4x512xf32>,
    return
  }
}

</mosaic_0001>

<llo_original>
// kernel: net_quantized_forward.1
$region0: #{net_quantized_forward.1}
  #allocation0 [shape = 'u32[]', space=smem, size = 0x4, offset = 0x4, fixed_abs, tag = 'smem constant byte address 0x4 - core index']
  #allocation1 [shape = 'u32[72,128]{1,0:T(1,128)}', space=vmem, size = 0x9000, scoped, tag = 'internal scratch']
  %s0 = inlined_call_operand.vmem [shape: f32[8], index: 0, kind: input, shape index: {}]
  %s1 = inlined_call_operand.vmem [shape: f32[8,512], index: 1, kind: input, shape index: {}]
  %s2 = inlined_call_operand.vmem [shape: f32[7,8,72], index: 2, kind: input, shape index: {}]
  %s3 = inlined_call_operand.vmem [shape: f32[72,512], index: 3, kind: input, shape index: {}]
  %s4 = inlined_call_operand.vmem [shape: f32[4,512], index: 4, kind: output, shape index: {}]
  %s5 = sld [smem:[#allocation0]]
  $region30: #{net_quantized_forward.1} parent=0
    _
  %s7 = ssub.s32 1, %s5
  %s8 = scalar_select 0, %s7, %s5
  $region1: #{net_quantized_forward.1} parent=0
    #allocation2 [shape = 'u8[512]{0}', space=smem, size = 0x200, scoped, tag = 'input window, operand 0, single buffered']
    #allocation3 [shape = 's32[1]{0}', space=sflag, size = 0x4, scoped, tag = 'scoped memory for net_quantized_forward.1']
    %9 = vsyncpa [#allocation3], 0
    // Predicated region
    $region2: #{net_quantized_forward.1} parent=1 // pred_check
      _
    $region3: #{net_quantized_forward.1} parent=1 // pred_check_branch
      %11 = sbr.rel (0) target = $region5
    $region4: #{net_quantized_forward.1} parent=1 // pred_region
      %13 = vsyncadd [#allocation3], 0
      %s15 = sshll.u32 %s0, 4
      %s16 = int_to_ptr.vmem [resolvable:$true] %s15
      %18 = dma.vmem_to_smem %s16, 16, [#allocation2], [#allocation3]
    $region5: #{net_quantized_forward.1} parent=1 // pred_fallthru
      _
    // Predicated region
    $region6: #{net_quantized_forward.1} parent=1 // pred_check
      _
    $region7: #{net_quantized_forward.1} parent=1 // pred_check_branch
      %20 = sbr.rel (0) target = $region9
    $region8: #{net_quantized_forward.1} parent=1 // pred_region
      _
    $region9: #{net_quantized_forward.1} parent=1 // pred_fallthru
      _
    // Predicated region
    $region10: #{net_quantized_forward.1} parent=1 // pred_check
      _
    $region11: #{net_quantized_forward.1} parent=1 // pred_check_branch
      %22 = sbr.rel (0) target = $region13
    $region12: #{net_quantized_forward.1} parent=1 // pred_region
      _
    $region13: #{net_quantized_forward.1} parent=1 // pred_fallthru
      _
    // Predicated region
    $region14: #{net_quantized_forward.1} parent=1 // pred_check
      _
    $region15: #{net_quantized_forward.1} parent=1 // pred_check_branch
      %24 = sbr.rel (0) target = $region17
    $region16: #{net_quantized_forward.1} parent=1 // pred_region
      _
    $region17: #{net_quantized_forward.1} parent=1 // pred_fallthru
      _
    // Predicated region
    $region18: #{net_quantized_forward.1} parent=1 // pred_check
      _
    $region19: #{net_quantized_forward.1} parent=1 // pred_check_branch
      %26 = sbr.rel (0) target = $region21
    $region20: #{net_quantized_forward.1} parent=1 // pred_region
      %28 = dma.done [#allocation3], 16
    $region21: #{net_quantized_forward.1} parent=1 // pred_fallthru
      _
    %29 = sfence
    %v30 = vld [vmem:[%s1] sm:$0xff]
    %v31 = vld [vmem:[%s1 + $0x8] sm:$0xff]
    %v32 = vld [vmem:[%s1 + $0x10] sm:$0xff]
    %v33 = vld [vmem:[%s1 + $0x18] sm:$0xff]
    %s34 = sld [smem:[#allocation2]]
    %v35 = vstv %s34
    %v36 = vmul.f32 %v30, %v35
    %v37 = vmul.f32 %v31, %v35
    %v38 = vmul.f32 %v32, %v35
    %v39 = vmul.f32 %v33, %v35
    %v40 = vfloor.f32 %v36
    %v41 = vfloor.f32 %v37
    %v42 = vfloor.f32 %v38
    %v43 = vfloor.f32 %v39
    %v44 = vmax.f32 %v40, -128.0
    %v45 = vmax.f32 %v41, -128.0
    %v46 = vmax.f32 %v42, -128.0
    %v47 = vmax.f32 %v43, -128.0
    %v48 = vmin.f32 %v44, 127.0
    %v49 = vmin.f32 %v45, 127.0
    %v50 = vmin.f32 %v46, 127.0
    %v51 = vmin.f32 %v47, 127.0
    %52 = vrot.lane.b32.xlu0 %v48, 17
    %v53 = vpop.permute.xlu0 %52
    %54 = vrot.lane.b32.xlu0 %v49, 17
    %v55 = vpop.permute.xlu0 %54
    %56 = vrot.lane.b32.xlu0 %v50, 17
    %v57 = vpop.permute.xlu0 %56
    %58 = vrot.lane.b32.xlu0 %v51, 17
    %v59 = vpop.permute.xlu0 %58
    %v60 = vlaneseq
    %v61 = vand.u32 %v60, 127
    %vm62 = vcmp.lt.s32.totalorder %v61, 17
    %v63 = vsel %vm62, %v57, %v59
    %v64 = vsel %vm62, %v55, %v57
    %v65 = vsel %vm62, %v53, %v55
    %v66 = vsel %vm62, %v59, %v53
    %v67 = vld [vmem:[%s3] sm:$0xff]
    %v68 = vld [vmem:[%s3 + $0x8] sm:$0xff]
    %v69 = vld [vmem:[%s3 + $0x10] sm:$0xff]
    %v70 = vld [vmem:[%s3 + $0x18] sm:$0xff]
    %v71 = vmul.f32 %v66, %v67
    %v72 = vmul.f32 %v65, %v68
    %v73 = vmul.f32 %v64, %v69
    %v74 = vmul.f32 %v63, %v70
    %75 = vrot.lane.b32.xlu0 %v48, 16
    %v76 = vpop.permute.xlu0 %75
    %77 = vrot.lane.b32.xlu0 %v49, 16
    %v78 = vpop.permute.xlu0 %77
    %79 = vrot.lane.b32.xlu0 %v50, 16
    %v80 = vpop.permute.xlu0 %79
    %81 = vrot.lane.b32.xlu0 %v51, 16
    %v82 = vpop.permute.xlu0 %81
    %vm83 = vcmp.lt.s32.totalorder %v61, 16
    %v84 = vsel %vm83, %v80, %v82
    %v85 = vsel %vm83, %v78, %v80
    %v86 = vsel %vm83, %v76, %v78
    %v87 = vsel %vm83, %v82, %v76
    %v88 = vld [vmem:[%s3 + $0x20] sm:$0xff]
    %v89 = vld [vmem:[%s3 + $0x28] sm:$0xff]
    %v90 = vld [vmem:[%s3 + $0x30] sm:$0xff]
    %v91 = vld [vmem:[%s3 + $0x38] sm:$0xff]
    %v92 = vmul.f32 %v87, %v88
    %v93 = vmul.f32 %v86, %v89
    %v94 = vmul.f32 %v85, %v90
    %v95 = vmul.f32 %v84, %v91
    %96 = vrot.lane.b32.xlu0 %v48, 15
    %v97 = vpop.permute.xlu0 %96
    %98 = vrot.lane.b32.xlu0 %v49, 15
    %v99 = vpop.permute.xlu0 %98
    %100 = vrot.lane.b32.xlu0 %v50, 15
    %v101 = vpop.permute.xlu0 %100
    %102 = vrot.lane.b32.xlu0 %v51, 15
    %v103 = vpop.permute.xlu0 %102
    %vm104 = vcmp.lt.s32.totalorder %v61, 15
    %v105 = vsel %vm104, %v101, %v103
    %v106 = vsel %vm104, %v99, %v101
    %v107 = vsel %vm104, %v97, %v99
    %v108 = vsel %vm104, %v103, %v97
    %v109 = vld [vmem:[%s3 + $0x40] sm:$0xff]
    %v110 = vld [vmem:[%s3 + $0x48] sm:$0xff]
    %v111 = vld [vmem:[%s3 + $0x50] sm:$0xff]
    %v112 = vld [vmem:[%s3 + $0x58] sm:$0xff]
    %v113 = vmul.f32 %v108, %v109
    %v114 = vmul.f32 %v107, %v110
    %v115 = vmul.f32 %v106, %v111
    %v116 = vmul.f32 %v105, %v112
    %117 = vrot.lane.b32.xlu0 %v48, 1
    %v118 = vpop.permute.xlu0 %117
    %119 = vrot.lane.b32.xlu0 %v49, 1
    %v120 = vpop.permute.xlu0 %119
    %121 = vrot.lane.b32.xlu0 %v50, 1
    %v122 = vpop.permute.xlu0 %121
    %123 = vrot.lane.b32.xlu0 %v51, 1
    %v124 = vpop.permute.xlu0 %123
    %vm125 = vcmp.lt.s32.totalorder %v61, 1
    %v126 = vsel %vm125, %v122, %v124
    %v127 = vsel %vm125, %v120, %v122
    %v128 = vsel %vm125, %v118, %v120
    %v129 = vsel %vm125, %v124, %v118
    %v130 = vld [vmem:[%s3 + $0x60] sm:$0xff]
    %v131 = vld [vmem:[%s3 + $0x68] sm:$0xff]
    %v132 = vld [vmem:[%s3 + $0x70] sm:$0xff]
    %v133 = vld [vmem:[%s3 + $0x78] sm:$0xff]
    %v134 = vmul.f32 %v129, %v130
    %v135 = vmul.f32 %v128, %v131
    %v136 = vmul.f32 %v127, %v132
    %v137 = vmul.f32 %v126, %v133
    %138 = vrot.lane.b32.xlu0 %v48, 127
    %v139 = vpop.permute.xlu0 %138
    %140 = vrot.lane.b32.xlu0 %v49, 127
    %v141 = vpop.permute.xlu0 %140
    %142 = vrot.lane.b32.xlu0 %v50, 127
    %v143 = vpop.permute.xlu0 %142
    %144 = vrot.lane.b32.xlu0 %v51, 127
    %v145 = vpop.permute.xlu0 %144
    %vm146 = vcmp.lt.s32.totalorder %v61, 127
    %v147 = vsel %vm146, %v143, %v145
    %v148 = vsel %vm146, %v141, %v143
    %v149 = vsel %vm146, %v139, %v141
    %v150 = vsel %vm146, %v145, %v139
    %v151 = vld [vmem:[%s3 + $0xa0] sm:$0xff]
    %v152 = vld [vmem:[%s3 + $0xa8] sm:$0xff]
    %v153 = vld [vmem:[%s3 + $0xb0] sm:$0xff]
    %v154 = vld [vmem:[%s3 + $0xb8] sm:$0xff]
    %v155 = vmul.f32 %v149, %v151
    %v156 = vmul.f32 %v148, %v152
    %v157 = vmul.f32 %v147, %v153
    %v158 = vmul.f32 %v150, %v154
    %159 = vrot.lane.b32.xlu0 %v48, 113
    %v160 = vpop.permute.xlu0 %159
    %161 = vrot.lane.b32.xlu0 %v49, 113
    %v162 = vpop.permute.xlu0 %161
    %163 = vrot.lane.b32.xlu0 %v50, 113
    %v164 = vpop.permute.xlu0 %163
    %165 = vrot.lane.b32.xlu0 %v51, 113
    %v166 = vpop.permute.xlu0 %165
    %vm167 = vcmp.lt.s32.totalorder %v61, 113
    %v168 = vsel %vm167, %v164, %v166
    %v169 = vsel %vm167, %v162, %v164
    %v170 = vsel %vm167, %v160, %v162
    %v171 = vsel %vm167, %v166, %v160
    %v172 = vld [vmem:[%s3 + $0xc0] sm:$0xff]
    %v173 = vld [vmem:[%s3 + $0xc8] sm:$0xff]
    %v174 = vld [vmem:[%s3 + $0xd0] sm:$0xff]
    %v175 = vld [vmem:[%s3 + $0xd8] sm:$0xff]
    %v176 = vmul.f32 %v170, %v172
    %v177 = vmul.f32 %v169, %v173
    %v178 = vmul.f32 %v168, %v174
    %v179 = vmul.f32 %v171, %v175
    %180 = vrot.lane.b32.xlu0 %v48, 112
    %v181 = vpop.permute.xlu0 %180
    %182 = vrot.lane.b32.xlu0 %v49, 112
    %v183 = vpop.permute.xlu0 %182
    %184 = vrot.lane.b32.xlu0 %v50, 112
    %v185 = vpop.permute.xlu0 %184
    %186 = vrot.lane.b32.xlu0 %v51, 112
    %v187 = vpop.permute.xlu0 %186
    %vm188 = vcmp.lt.s32.totalorder %v61, 112
    %v189 = vsel %vm188, %v185, %v187
    %v190 = vsel %vm188, %v183, %v185
    %v191 = vsel %vm188, %v181, %v183
    %v192 = vsel %vm188, %v187, %v181
    %v193 = vld [vmem:[%s3 + $0xe0] sm:$0xff]
    %v194 = vld [vmem:[%s3 + $0xe8] sm:$0xff]
    %v195 = vld [vmem:[%s3 + $0xf0] sm:$0xff]
    %v196 = vld [vmem:[%s3 + $0xf8] sm:$0xff]
    %v197 = vmul.f32 %v191, %v193
    %v198 = vmul.f32 %v190, %v194
    %v199 = vmul.f32 %v189, %v195
    %v200 = vmul.f32 %v192, %v196
    %201 = vrot.lane.b32.xlu0 %v48, 111
    %v202 = vpop.permute.xlu0 %201
    %203 = vrot.lane.b32.xlu0 %v49, 111
    %v204 = vpop.permute.xlu0 %203
    %205 = vrot.lane.b32.xlu0 %v50, 111
    %v206 = vpop.permute.xlu0 %205
    %207 = vrot.lane.b32.xlu0 %v51, 111
    %v208 = vpop.permute.xlu0 %207
    %vm209 = vcmp.lt.s32.totalorder %v61, 111
    %v210 = vsel %vm209, %v206, %v208
    %v211 = vsel %vm209, %v204, %v206
    %v212 = vsel %vm209, %v202, %v204
    %v213 = vsel %vm209, %v208, %v202
    %v214 = vld [vmem:[%s3 + $0x100] sm:$0xff]
    %v215 = vld [vmem:[%s3 + $0x108] sm:$0xff]
    %v216 = vld [vmem:[%s3 + $0x110] sm:$0xff]
    %v217 = vld [vmem:[%s3 + $0x118] sm:$0xff]
    %v218 = vmul.f32 %v212, %v214
    %v219 = vmul.f32 %v211, %v215
    %v220 = vmul.f32 %v210, %v216
    %v221 = vmul.f32 %v213, %v217
    %v222 = vld [vmem:[%s2] sm:$0xff]
    %vm223 = vcmask 588800
    %v225 = vsel %vm223, %v222, 0
    %227 = vmatpush.msra.mxu0 0.0
    %228 = vmatpush.msra.mxu0 0.0
    %229 = vmatpush.msra.mxu0 0.0
    %230 = vmatpush.msra.mxu0 0.0
    %231 = vmatpush.msra.mxu0 0.0
    %232 = vmatpush.msra.mxu0 0.0
    %233 = vmatpush.msra.mxu0 0.0
    %234 = vmatpush.msra.mxu0 %v218
    %235 = vmatpush.msra.mxu0 %v197
    %236 = vmatpush.msra.mxu0 %v176
    %237 = vmatpush.msra.mxu0 %v155
    %238 = vmatpush.msra.mxu0 %v48
    %239 = vmatpush.msra.mxu0 %v134
    %240 = vmatpush.msra.mxu0 %v113
    %241 = vmatpush.msra.mxu0 %v92
    %242 = vmatpush.msra.mxu0 %v71
    %243 = vmatmul.f32.gmra.mxu0 %v225
    %v244 = vpop.f32.mrf.mxu0
    %v245 = vadd.f32 0.0, %v244
    %246 = vdwg.mxu0
    %247 = vmatpush.msra.mxu0 0.0
    %248 = vmatpush.msra.mxu0 0.0
    %249 = vmatpush.msra.mxu0 0.0
    %250 = vmatpush.msra.mxu0 0.0
    %251 = vmatpush.msra.mxu0 0.0
    %252 = vmatpush.msra.mxu0 0.0
    %253 = vmatpush.msra.mxu0 0.0
    %254 = vmatpush.msra.mxu0 %v219
    %255 = vmatpush.msra.mxu0 %v198
    %256 = vmatpush.msra.mxu0 %v177
    %257 = vmatpush.msra.mxu0 %v156
    %258 = vmatpush.msra.mxu0 %v49
    %259 = vmatpush.msra.mxu0 %v135
    %260 = vmatpush.msra.mxu0 %v114
    %261 = vmatpush.msra.mxu0 %v93
    %262 = vmatpush.msra.mxu0 %v72
    %263 = vmatmul.f32.gmra.mxu0 %v225
    %v264 = vpop.f32.mrf.mxu0
    %v265 = vadd.f32 0.0, %v264
    %266 = vdwg.mxu0
    %267 = vmatpush.msra.mxu0 0.0
    %268 = vmatpush.msra.mxu0 0.0
    %269 = vmatpush.msra.mxu0 0.0
    %270 = vmatpush.msra.mxu0 0.0
    %271 = vmatpush.msra.mxu0 0.0
    %272 = vmatpush.msra.mxu0 0.0
    %273 = vmatpush.msra.mxu0 0.0
    %274 = vmatpush.msra.mxu0 %v220
    %275 = vmatpush.msra.mxu0 %v199
    %276 = vmatpush.msra.mxu0 %v178
    %277 = vmatpush.msra.mxu0 %v157
    %278 = vmatpush.msra.mxu0 %v50
    %279 = vmatpush.msra.mxu0 %v136
    %280 = vmatpush.msra.mxu0 %v115
    %281 = vmatpush.msra.mxu0 %v94
    %282 = vmatpush.msra.mxu0 %v73
    %283 = vmatmul.f32.gmra.mxu0 %v225
    %v284 = vpop.f32.mrf.mxu0
    %v285 = vadd.f32 0.0, %v284
    %286 = vdwg.mxu0
    %287 = vmatpush.msra.mxu0 0.0
    %288 = vmatpush.msra.mxu0 0.0
    %289 = vmatpush.msra.mxu0 0.0
    %290 = vmatpush.msra.mxu0 0.0
    %291 = vmatpush.msra.mxu0 0.0
    %292 = vmatpush.msra.mxu0 0.0
    %293 = vmatpush.msra.mxu0 0.0
    %294 = vmatpush.msra.mxu0 %v221
    %295 = vmatpush.msra.mxu0 %v200
    %296 = vmatpush.msra.mxu0 %v179
    %297 = vmatpush.msra.mxu0 %v158
    %298 = vmatpush.msra.mxu0 %v51
    %299 = vmatpush.msra.mxu0 %v137
    %300 = vmatpush.msra.mxu0 %v116
    %301 = vmatpush.msra.mxu0 %v95
    %302 = vmatpush.msra.mxu0 %v74
    %303 = vmatmul.f32.gmra.mxu0 %v225
    %v304 = vpop.f32.mrf.mxu0
    %v305 = vadd.f32 0.0, %v304
    %306 = vdwg.mxu0
    %v307 = vmax.f32 %v245, 0.0
    %v308 = vmax.f32 %v265, 0.0
    %v309 = vmax.f32 %v285, 0.0
    %v310 = vmax.f32 %v305, 0.0
    %s311 = sld [smem:[#allocation2 + $0x1]]
    %v312 = vstv %s311
    %v313 = vmul.f32 %v307, %v312
    %v314 = vmul.f32 %v308, %v312
    %v315 = vmul.f32 %v309, %v312
    %v316 = vmul.f32 %v310, %v312
    %v317 = vfloor.f32 %v313
    %v318 = vfloor.f32 %v314
    %v319 = vfloor.f32 %v315
    %v320 = vfloor.f32 %v316
    %v321 = vmax.f32 %v317, -128.0
    %v322 = vmax.f32 %v318, -128.0
    %v323 = vmax.f32 %v319, -128.0
    %v324 = vmax.f32 %v320, -128.0
    %v325 = vmin.f32 %v321, 127.0
    %v326 = vmin.f32 %v322, 127.0
    %v327 = vmin.f32 %v323, 127.0
    %v328 = vmin.f32 %v324, 127.0
    %329 = vrot.lane.b32.xlu0 %v325, 17
    %v330 = vpop.permute.xlu0 %329
    %331 = vrot.lane.b32.xlu0 %v326, 17
    %v332 = vpop.permute.xlu0 %331
    %333 = vrot.lane.b32.xlu0 %v327, 17
    %v334 = vpop.permute.xlu0 %333
    %335 = vrot.lane.b32.xlu0 %v328, 17
    %v336 = vpop.permute.xlu0 %335
    %v337 = vsel %vm62, %v334, %v336
    %v338 = vsel %vm62, %v332, %v334
    %v339 = vsel %vm62, %v330, %v332
    %v340 = vsel %vm62, %v336, %v330
    %v341 = vmul.f32 %v340, %v67
    %v342 = vmul.f32 %v339, %v68
    %v343 = vmul.f32 %v338, %v69
    %v344 = vmul.f32 %v337, %v70
    %345 = vrot.lane.b32.xlu0 %v325, 16
    %v346 = vpop.permute.xlu0 %345
    %347 = vrot.lane.b32.xlu0 %v326, 16
    %v348 = vpop.permute.xlu0 %347
    %349 = vrot.lane.b32.xlu0 %v327, 16
    %v350 = vpop.permute.xlu0 %349
    %351 = vrot.lane.b32.xlu0 %v328, 16
    %v352 = vpop.permute.xlu0 %351
    %v353 = vsel %vm83, %v350, %v352
    %v354 = vsel %vm83, %v348, %v350
    %v355 = vsel %vm83, %v346, %v348
    %v356 = vsel %vm83, %v352, %v346
    %v357 = vmul.f32 %v356, %v88
    %v358 = vmul.f32 %v355, %v89
    %v359 = vmul.f32 %v354, %v90
    %v360 = vmul.f32 %v353, %v91
    %361 = vrot.lane.b32.xlu0 %v325, 15
    %v362 = vpop.permute.xlu0 %361
    %363 = vrot.lane.b32.xlu0 %v326, 15
    %v364 = vpop.permute.xlu0 %363
    %365 = vrot.lane.b32.xlu0 %v327, 15
    %v366 = vpop.permute.xlu0 %365
    %367 = vrot.lane.b32.xlu0 %v328, 15
    %v368 = vpop.permute.xlu0 %367
    %v369 = vsel %vm104, %v366, %v368
    %v370 = vsel %vm104, %v364, %v366
    %v371 = vsel %vm104, %v362, %v364
    %v372 = vsel %vm104, %v368, %v362
    %v373 = vmul.f32 %v372, %v109
    %v374 = vmul.f32 %v371, %v110
    %v375 = vmul.f32 %v370, %v111
    %v376 = vmul.f32 %v369, %v112
    %377 = vrot.lane.b32.xlu0 %v325, 1
    %v378 = vpop.permute.xlu0 %377
    %379 = vrot.lane.b32.xlu0 %v326, 1
    %v380 = vpop.permute.xlu0 %379
    %381 = vrot.lane.b32.xlu0 %v327, 1
    %v382 = vpop.permute.xlu0 %381
    %383 = vrot.lane.b32.xlu0 %v328, 1
    %v384 = vpop.permute.xlu0 %383
    %v385 = vsel %vm125, %v382, %v384
    %v386 = vsel %vm125, %v380, %v382
    %v387 = vsel %vm125, %v378, %v380
    %v388 = vsel %vm125, %v384, %v378
    %v389 = vmul.f32 %v388, %v130
    %v390 = vmul.f32 %v387, %v131
    %v391 = vmul.f32 %v386, %v132
    %v392 = vmul.f32 %v385, %v133
    %393 = vrot.lane.b32.xlu0 %v325, 127
    %v394 = vpop.permute.xlu0 %393
    %395 = vrot.lane.b32.xlu0 %v326, 127
    %v396 = vpop.permute.xlu0 %395
    %397 = vrot.lane.b32.xlu0 %v327, 127
    %v398 = vpop.permute.xlu0 %397
    %399 = vrot.lane.b32.xlu0 %v328, 127
    %v400 = vpop.permute.xlu0 %399
    %v401 = vsel %vm146, %v398, %v400
    %v402 = vsel %vm146, %v396, %v398
    %v403 = vsel %vm146, %v394, %v396
    %v404 = vsel %vm146, %v400, %v394
    %v405 = vmul.f32 %v403, %v151
    %v406 = vmul.f32 %v402, %v152
    %v407 = vmul.f32 %v401, %v153
    %v408 = vmul.f32 %v404, %v154
    %409 = vrot.lane.b32.xlu0 %v325, 113
    %v410 = vpop.permute.xlu0 %409
    %411 = vrot.lane.b32.xlu0 %v326, 113
    %v412 = vpop.permute.xlu0 %411
    %413 = vrot.lane.b32.xlu0 %v327, 113
    %v414 = vpop.permute.xlu0 %413
    %415 = vrot.lane.b32.xlu0 %v328, 113
    %v416 = vpop.permute.xlu0 %415
    %v417 = vsel %vm167, %v414, %v416
    %v418 = vsel %vm167, %v412, %v414
    %v419 = vsel %vm167, %v410, %v412
    %v420 = vsel %vm167, %v416, %v410
    %v421 = vmul.f32 %v419, %v172
    %v422 = vmul.f32 %v418, %v173
    %v423 = vmul.f32 %v417, %v174
    %v424 = vmul.f32 %v420, %v175
    %425 = vrot.lane.b32.xlu0 %v325, 112
    %v426 = vpop.permute.xlu0 %425
    %427 = vrot.lane.b32.xlu0 %v326, 112
    %v428 = vpop.permute.xlu0 %427
    %429 = vrot.lane.b32.xlu0 %v327, 112
    %v430 = vpop.permute.xlu0 %429
    %431 = vrot.lane.b32.xlu0 %v328, 112
    %v432 = vpop.permute.xlu0 %431
    %v433 = vsel %vm188, %v430, %v432
    %v434 = vsel %vm188, %v428, %v430
    %v435 = vsel %vm188, %v426, %v428
    %v436 = vsel %vm188, %v432, %v426
    %v437 = vmul.f32 %v435, %v193
    %v438 = vmul.f32 %v434, %v194
    %v439 = vmul.f32 %v433, %v195
    %v440 = vmul.f32 %v436, %v196
    %441 = vrot.lane.b32.xlu0 %v325, 111
    %v442 = vpop.permute.xlu0 %441
    %443 = vrot.lane.b32.xlu0 %v326, 111
    %v444 = vpop.permute.xlu0 %443
    %445 = vrot.lane.b32.xlu0 %v327, 111
    %v446 = vpop.permute.xlu0 %445
    %447 = vrot.lane.b32.xlu0 %v328, 111
    %v448 = vpop.permute.xlu0 %447
    %v449 = vsel %vm209, %v446, %v448
    %v450 = vsel %vm209, %v444, %v446
    %v451 = vsel %vm209, %v442, %v444
    %v452 = vsel %vm209, %v448, %v442
    %v453 = vmul.f32 %v451, %v214
    %v454 = vmul.f32 %v450, %v215
    %v455 = vmul.f32 %v449, %v216
    %v456 = vmul.f32 %v452, %v217
    %s457 = scalar_lea.vmem %s2, 8
    %v458 = vld [vmem:[%s457] sm:$0xff]
    %v460 = vsel %vm223, %v458, 0
    %462 = vmatpush.msra.mxu0 0.0
    %463 = vmatpush.msra.mxu0 0.0
    %464 = vmatpush.msra.mxu0 0.0
    %465 = vmatpush.msra.mxu0 0.0
    %466 = vmatpush.msra.mxu0 0.0
    %467 = vmatpush.msra.mxu0 0.0
    %468 = vmatpush.msra.mxu0 0.0
    %469 = vmatpush.msra.mxu0 %v453
    %470 = vmatpush.msra.mxu0 %v437
    %471 = vmatpush.msra.mxu0 %v421
    %472 = vmatpush.msra.mxu0 %v405
    %473 = vmatpush.msra.mxu0 %v325
    %474 = vmatpush.msra.mxu0 %v389
    %475 = vmatpush.msra.mxu0 %v373
    %476 = vmatpush.msra.mxu0 %v357
    %477 = vmatpush.msra.mxu0 %v341
    %478 = vmatmul.f32.gmra.mxu0 %v460
    %v479 = vpop.f32.mrf.mxu0
    %v480 = vadd.f32 0.0, %v479
    %481 = vdwg.mxu0
    %482 = vmatpush.msra.mxu0 0.0
    %483 = vmatpush.msra.mxu0 0.0
    %484 = vmatpush.msra.mxu0 0.0
    %485 = vmatpush.msra.mxu0 0.0
    %486 = vmatpush.msra.mxu0 0.0
    %487 = vmatpush.msra.mxu0 0.0
    %488 = vmatpush.msra.mxu0 0.0
    %489 = vmatpush.msra.mxu0 %v454
    %490 = vmatpush.msra.mxu0 %v438
    %491 = vmatpush.msra.mxu0 %v422
    %492 = vmatpush.msra.mxu0 %v406
    %493 = vmatpush.msra.mxu0 %v326
    %494 = vmatpush.msra.mxu0 %v390
    %495 = vmatpush.msra.mxu0 %v374
    %496 = vmatpush.msra.mxu0 %v358
    %497 = vmatpush.msra.mxu0 %v342
    %498 = vmatmul.f32.gmra.mxu0 %v460
    %v499 = vpop.f32.mrf.mxu0
    %v500 = vadd.f32 0.0, %v499
    %501 = vdwg.mxu0
    %502 = vmatpush.msra.mxu0 0.0
    %503 = vmatpush.msra.mxu0 0.0
    %504 = vmatpush.msra.mxu0 0.0
    %505 = vmatpush.msra.mxu0 0.0
    %506 = vmatpush.msra.mxu0 0.0
    %507 = vmatpush.msra.mxu0 0.0
    %508 = vmatpush.msra.mxu0 0.0
    %509 = vmatpush.msra.mxu0 %v455
    %510 = vmatpush.msra.mxu0 %v439
    %511 = vmatpush.msra.mxu0 %v423
    %512 = vmatpush.msra.mxu0 %v407
    %513 = vmatpush.msra.mxu0 %v327
    %514 = vmatpush.msra.mxu0 %v391
    %515 = vmatpush.msra.mxu0 %v375
    %516 = vmatpush.msra.mxu0 %v359
    %517 = vmatpush.msra.mxu0 %v343
    %518 = vmatmul.f32.gmra.mxu0 %v460
    %v519 = vpop.f32.mrf.mxu0
    %v520 = vadd.f32 0.0, %v519
    %521 = vdwg.mxu0
    %522 = vmatpush.msra.mxu0 0.0
    %523 = vmatpush.msra.mxu0 0.0
    %524 = vmatpush.msra.mxu0 0.0
    %525 = vmatpush.msra.mxu0 0.0
    %526 = vmatpush.msra.mxu0 0.0
    %527 = vmatpush.msra.mxu0 0.0
    %528 = vmatpush.msra.mxu0 0.0
    %529 = vmatpush.msra.mxu0 %v456
    %530 = vmatpush.msra.mxu0 %v440
    %531 = vmatpush.msra.mxu0 %v424
    %532 = vmatpush.msra.mxu0 %v408
    %533 = vmatpush.msra.mxu0 %v328
    %534 = vmatpush.msra.mxu0 %v392
    %535 = vmatpush.msra.mxu0 %v376
    %536 = vmatpush.msra.mxu0 %v360
    %537 = vmatpush.msra.mxu0 %v344
    %538 = vmatmul.f32.gmra.mxu0 %v460
    %v539 = vpop.f32.mrf.mxu0
    %v540 = vadd.f32 0.0, %v539
    %541 = vdwg.mxu0
    %v542 = vmax.f32 %v480, 0.0
    %v543 = vmax.f32 %v500, 0.0
    %v544 = vmax.f32 %v520, 0.0
    %v545 = vmax.f32 %v540, 0.0
    %s546 = sld [smem:[#allocation2 + $0x2]]
    %v547 = vstv %s546
    %v548 = vmul.f32 %v542, %v547
    %v549 = vmul.f32 %v543, %v547
    %v550 = vmul.f32 %v544, %v547
    %v551 = vmul.f32 %v545, %v547
    %v552 = vfloor.f32 %v548
    %v553 = vfloor.f32 %v549
    %v554 = vfloor.f32 %v550
    %v555 = vfloor.f32 %v551
    %v556 = vmax.f32 %v552, -128.0
    %v557 = vmax.f32 %v553, -128.0
    %v558 = vmax.f32 %v554, -128.0
    %v559 = vmax.f32 %v555, -128.0
    %v560 = vmin.f32 %v556, 127.0
    %v561 = vmin.f32 %v557, 127.0
    %v562 = vmin.f32 %v558, 127.0
    %v563 = vmin.f32 %v559, 127.0
    %564 = vrot.lane.b32.xlu0 %v560, 17
    %v565 = vpop.permute.xlu0 %564
    %566 = vrot.lane.b32.xlu0 %v561, 17
    %v567 = vpop.permute.xlu0 %566
    %568 = vrot.lane.b32.xlu0 %v562, 17
    %v569 = vpop.permute.xlu0 %568
    %570 = vrot.lane.b32.xlu0 %v563, 17
    %v571 = vpop.permute.xlu0 %570
    %v572 = vsel %vm62, %v569, %v571
    %v573 = vsel %vm62, %v567, %v569
    %v574 = vsel %vm62, %v565, %v567
    %v575 = vsel %vm62, %v571, %v565
    %v576 = vmul.f32 %v575, %v67
    %v577 = vmul.f32 %v574, %v68
    %v578 = vmul.f32 %v573, %v69
    %v579 = vmul.f32 %v572, %v70
    %580 = vrot.lane.b32.xlu0 %v560, 16
    %v581 = vpop.permute.xlu0 %580
    %582 = vrot.lane.b32.xlu0 %v561, 16
    %v583 = vpop.permute.xlu0 %582
    %584 = vrot.lane.b32.xlu0 %v562, 16
    %v585 = vpop.permute.xlu0 %584
    %586 = vrot.lane.b32.xlu0 %v563, 16
    %v587 = vpop.permute.xlu0 %586
    %v588 = vsel %vm83, %v585, %v587
    %v589 = vsel %vm83, %v583, %v585
    %v590 = vsel %vm83, %v581, %v583
    %v591 = vsel %vm83, %v587, %v581
    %v592 = vmul.f32 %v591, %v88
    %v593 = vmul.f32 %v590, %v89
    %v594 = vmul.f32 %v589, %v90
    %v595 = vmul.f32 %v588, %v91
    %596 = vrot.lane.b32.xlu0 %v560, 15
    %v597 = vpop.permute.xlu0 %596
    %598 = vrot.lane.b32.xlu0 %v561, 15
    %v599 = vpop.permute.xlu0 %598
    %600 = vrot.lane.b32.xlu0 %v562, 15
    %v601 = vpop.permute.xlu0 %600
    %602 = vrot.lane.b32.xlu0 %v563, 15
    %v603 = vpop.permute.xlu0 %602
    %v604 = vsel %vm104, %v601, %v603
    %v605 = vsel %vm104, %v599, %v601
    %v606 = vsel %vm104, %v597, %v599
    %v607 = vsel %vm104, %v603, %v597
    %v608 = vmul.f32 %v607, %v109
    %v609 = vmul.f32 %v606, %v110
    %v610 = vmul.f32 %v605, %v111
    %v611 = vmul.f32 %v604, %v112
    %612 = vrot.lane.b32.xlu0 %v560, 1
    %v613 = vpop.permute.xlu0 %612
    %614 = vrot.lane.b32.xlu0 %v561, 1
    %v615 = vpop.permute.xlu0 %614
    %616 = vrot.lane.b32.xlu0 %v562, 1
    %v617 = vpop.permute.xlu0 %616
    %618 = vrot.lane.b32.xlu0 %v563, 1
    %v619 = vpop.permute.xlu0 %618
    %v620 = vsel %vm125, %v617, %v619
    %v621 = vsel %vm125, %v615, %v617
    %v622 = vsel %vm125, %v613, %v615
    %v623 = vsel %vm125, %v619, %v613
    %v624 = vmul.f32 %v623, %v130
    %v625 = vmul.f32 %v622, %v131
    %v626 = vmul.f32 %v621, %v132
    %v627 = vmul.f32 %v620, %v133
    %628 = vrot.lane.b32.xlu0 %v560, 127
    %v629 = vpop.permute.xlu0 %628
    %630 = vrot.lane.b32.xlu0 %v561, 127
    %v631 = vpop.permute.xlu0 %630
    %632 = vrot.lane.b32.xlu0 %v562, 127
    %v633 = vpop.permute.xlu0 %632
    %634 = vrot.lane.b32.xlu0 %v563, 127
    %v635 = vpop.permute.xlu0 %634
    %v636 = vsel %vm146, %v633, %v635
    %v637 = vsel %vm146, %v631, %v633
    %v638 = vsel %vm146, %v629, %v631
    %v639 = vsel %vm146, %v635, %v629
    %v640 = vmul.f32 %v638, %v151
    %v641 = vmul.f32 %v637, %v152
    %v642 = vmul.f32 %v636, %v153
    %v643 = vmul.f32 %v639, %v154
    %644 = vrot.lane.b32.xlu0 %v560, 113
    %v645 = vpop.permute.xlu0 %644
    %646 = vrot.lane.b32.xlu0 %v561, 113
    %v647 = vpop.permute.xlu0 %646
    %648 = vrot.lane.b32.xlu0 %v562, 113
    %v649 = vpop.permute.xlu0 %648
    %650 = vrot.lane.b32.xlu0 %v563, 113
    %v651 = vpop.permute.xlu0 %650
    %v652 = vsel %vm167, %v649, %v651
    %v653 = vsel %vm167, %v647, %v649
    %v654 = vsel %vm167, %v645, %v647
    %v655 = vsel %vm167, %v651, %v645
    %v656 = vmul.f32 %v654, %v172
    %v657 = vmul.f32 %v653, %v173
    %v658 = vmul.f32 %v652, %v174
    %v659 = vmul.f32 %v655, %v175
    %660 = vrot.lane.b32.xlu0 %v560, 112
    %v661 = vpop.permute.xlu0 %660
    %662 = vrot.lane.b32.xlu0 %v561, 112
    %v663 = vpop.permute.xlu0 %662
    %664 = vrot.lane.b32.xlu0 %v562, 112
    %v665 = vpop.permute.xlu0 %664
    %666 = vrot.lane.b32.xlu0 %v563, 112
    %v667 = vpop.permute.xlu0 %666
    %v668 = vsel %vm188, %v665, %v667
    %v669 = vsel %vm188, %v663, %v665
    %v670 = vsel %vm188, %v661, %v663
    %v671 = vsel %vm188, %v667, %v661
    %v672 = vmul.f32 %v670, %v193
    %v673 = vmul.f32 %v669, %v194
    %v674 = vmul.f32 %v668, %v195
    %v675 = vmul.f32 %v671, %v196
    %676 = vrot.lane.b32.xlu0 %v560, 111
    %v677 = vpop.permute.xlu0 %676
    %678 = vrot.lane.b32.xlu0 %v561, 111
    %v679 = vpop.permute.xlu0 %678
    %680 = vrot.lane.b32.xlu0 %v562, 111
    %v681 = vpop.permute.xlu0 %680
    %682 = vrot.lane.b32.xlu0 %v563, 111
    %v683 = vpop.permute.xlu0 %682
    %v684 = vsel %vm209, %v681, %v683
    %v685 = vsel %vm209, %v679, %v681
    %v686 = vsel %vm209, %v677, %v679
    %v687 = vsel %vm209, %v683, %v677
    %v688 = vmul.f32 %v686, %v214
    %v689 = vmul.f32 %v685, %v215
    %v690 = vmul.f32 %v684, %v216
    %v691 = vmul.f32 %v687, %v217
    %s692 = scalar_lea.vmem %s2, 16
    %v693 = vld [vmem:[%s692] sm:$0xff]
    %v695 = vsel %vm223, %v693, 0
    %697 = vmatpush.msra.mxu0 0.0
    %698 = vmatpush.msra.mxu0 0.0
    %699 = vmatpush.msra.mxu0 0.0
    %700 = vmatpush.msra.mxu0 0.0
    %701 = vmatpush.msra.mxu0 0.0
    %702 = vmatpush.msra.mxu0 0.0
    %703 = vmatpush.msra.mxu0 0.0
    %704 = vmatpush.msra.mxu0 %v688
    %705 = vmatpush.msra.mxu0 %v672
    %706 = vmatpush.msra.mxu0 %v656
    %707 = vmatpush.msra.mxu0 %v640
    %708 = vmatpush.msra.mxu0 %v560
    %709 = vmatpush.msra.mxu0 %v624
    %710 = vmatpush.msra.mxu0 %v608
    %711 = vmatpush.msra.mxu0 %v592
    %712 = vmatpush.msra.mxu0 %v576
    %713 = vmatmul.f32.gmra.mxu0 %v695
    %v714 = vpop.f32.mrf.mxu0
    %v715 = vadd.f32 0.0, %v714
    %716 = vdwg.mxu0
    %717 = vmatpush.msra.mxu0 0.0
    %718 = vmatpush.msra.mxu0 0.0
    %719 = vmatpush.msra.mxu0 0.0
    %720 = vmatpush.msra.mxu0 0.0
    %721 = vmatpush.msra.mxu0 0.0
    %722 = vmatpush.msra.mxu0 0.0
    %723 = vmatpush.msra.mxu0 0.0
    %724 = vmatpush.msra.mxu0 %v689
    %725 = vmatpush.msra.mxu0 %v673
    %726 = vmatpush.msra.mxu0 %v657
    %727 = vmatpush.msra.mxu0 %v641
    %728 = vmatpush.msra.mxu0 %v561
    %729 = vmatpush.msra.mxu0 %v625
    %730 = vmatpush.msra.mxu0 %v609
    %731 = vmatpush.msra.mxu0 %v593
    %732 = vmatpush.msra.mxu0 %v577
    %733 = vmatmul.f32.gmra.mxu0 %v695
    %v734 = vpop.f32.mrf.mxu0
    %v735 = vadd.f32 0.0, %v734
    %736 = vdwg.mxu0
    %737 = vmatpush.msra.mxu0 0.0
    %738 = vmatpush.msra.mxu0 0.0
    %739 = vmatpush.msra.mxu0 0.0
    %740 = vmatpush.msra.mxu0 0.0
    %741 = vmatpush.msra.mxu0 0.0
    %742 = vmatpush.msra.mxu0 0.0
    %743 = vmatpush.msra.mxu0 0.0
    %744 = vmatpush.msra.mxu0 %v690
    %745 = vmatpush.msra.mxu0 %v674
    %746 = vmatpush.msra.mxu0 %v658
    %747 = vmatpush.msra.mxu0 %v642
    %748 = vmatpush.msra.mxu0 %v562
    %749 = vmatpush.msra.mxu0 %v626
    %750 = vmatpush.msra.mxu0 %v610
    %751 = vmatpush.msra.mxu0 %v594
    %752 = vmatpush.msra.mxu0 %v578
    %753 = vmatmul.f32.gmra.mxu0 %v695
    %v754 = vpop.f32.mrf.mxu0
    %v755 = vadd.f32 0.0, %v754
    %756 = vdwg.mxu0
    %757 = vmatpush.msra.mxu0 0.0
    %758 = vmatpush.msra.mxu0 0.0
    %759 = vmatpush.msra.mxu0 0.0
    %760 = vmatpush.msra.mxu0 0.0
    %761 = vmatpush.msra.mxu0 0.0
    %762 = vmatpush.msra.mxu0 0.0
    %763 = vmatpush.msra.mxu0 0.0
    %764 = vmatpush.msra.mxu0 %v691
    %765 = vmatpush.msra.mxu0 %v675
    %766 = vmatpush.msra.mxu0 %v659
    %767 = vmatpush.msra.mxu0 %v643
    %768 = vmatpush.msra.mxu0 %v563
    %769 = vmatpush.msra.mxu0 %v627
    %770 = vmatpush.msra.mxu0 %v611
    %771 = vmatpush.msra.mxu0 %v595
    %772 = vmatpush.msra.mxu0 %v579
    %773 = vmatmul.f32.gmra.mxu0 %v695
    %v774 = vpop.f32.mrf.mxu0
    %v775 = vadd.f32 0.0, %v774
    %776 = vdwg.mxu0
    %v777 = vmax.f32 %v715, 0.0
    %v778 = vmax.f32 %v735, 0.0
    %v779 = vmax.f32 %v755, 0.0
    %v780 = vmax.f32 %v775, 0.0
    %s781 = sld [smem:[#allocation2 + $0x3]]
    %v782 = vstv %s781
    %v783 = vmul.f32 %v777, %v782
    %v784 = vmul.f32 %v778, %v782
    %v785 = vmul.f32 %v779, %v782
    %v786 = vmul.f32 %v780, %v782
    %v787 = vfloor.f32 %v783
    %v788 = vfloor.f32 %v784
    %v789 = vfloor.f32 %v785
    %v790 = vfloor.f32 %v786
    %v791 = vmax.f32 %v787, -128.0
    %v792 = vmax.f32 %v788, -128.0
    %v793 = vmax.f32 %v789, -128.0
    %v794 = vmax.f32 %v790, -128.0
    %v795 = vmin.f32 %v791, 127.0
    %v796 = vmin.f32 %v792, 127.0
    %v797 = vmin.f32 %v793, 127.0
    %v798 = vmin.f32 %v794, 127.0
    %799 = vrot.lane.b32.xlu0 %v795, 17
    %v800 = vpop.permute.xlu0 %799
    %801 = vrot.lane.b32.xlu0 %v796, 17
    %v802 = vpop.permute.xlu0 %801
    %803 = vrot.lane.b32.xlu0 %v797, 17
    %v804 = vpop.permute.xlu0 %803
    %805 = vrot.lane.b32.xlu0 %v798, 17
    %v806 = vpop.permute.xlu0 %805
    %v807 = vsel %vm62, %v804, %v806
    %v808 = vsel %vm62, %v802, %v804
    %v809 = vsel %vm62, %v800, %v802
    %v810 = vsel %vm62, %v806, %v800
    %v811 = vmul.f32 %v810, %v67
    %v812 = vmul.f32 %v809, %v68
    %v813 = vmul.f32 %v808, %v69
    %v814 = vmul.f32 %v807, %v70
    %815 = vrot.lane.b32.xlu0 %v795, 16
    %v816 = vpop.permute.xlu0 %815
    %817 = vrot.lane.b32.xlu0 %v796, 16
    %v818 = vpop.permute.xlu0 %817
    %819 = vrot.lane.b32.xlu0 %v797, 16
    %v820 = vpop.permute.xlu0 %819
    %821 = vrot.lane.b32.xlu0 %v798, 16
    %v822 = vpop.permute.xlu0 %821
    %v823 = vsel %vm83, %v820, %v822
    %v824 = vsel %vm83, %v818, %v820
    %v825 = vsel %vm83, %v816, %v818
    %v826 = vsel %vm83, %v822, %v816
    %v827 = vmul.f32 %v826, %v88
    %v828 = vmul.f32 %v825, %v89
    %v829 = vmul.f32 %v824, %v90
    %v830 = vmul.f32 %v823, %v91
    %831 = vrot.lane.b32.xlu0 %v795, 15
    %v832 = vpop.permute.xlu0 %831
    %833 = vrot.lane.b32.xlu0 %v796, 15
    %v834 = vpop.permute.xlu0 %833
    %835 = vrot.lane.b32.xlu0 %v797, 15
    %v836 = vpop.permute.xlu0 %835
    %837 = vrot.lane.b32.xlu0 %v798, 15
    %v838 = vpop.permute.xlu0 %837
    %v839 = vsel %vm104, %v836, %v838
    %v840 = vsel %vm104, %v834, %v836
    %v841 = vsel %vm104, %v832, %v834
    %v842 = vsel %vm104, %v838, %v832
    %v843 = vmul.f32 %v842, %v109
    %v844 = vmul.f32 %v841, %v110
    %v845 = vmul.f32 %v840, %v111
    %v846 = vmul.f32 %v839, %v112
    %847 = vrot.lane.b32.xlu0 %v795, 1
    %v848 = vpop.permute.xlu0 %847
    %849 = vrot.lane.b32.xlu0 %v796, 1
    %v850 = vpop.permute.xlu0 %849
    %851 = vrot.lane.b32.xlu0 %v797, 1
    %v852 = vpop.permute.xlu0 %851
    %853 = vrot.lane.b32.xlu0 %v798, 1
    %v854 = vpop.permute.xlu0 %853
    %v855 = vsel %vm125, %v852, %v854
    %v856 = vsel %vm125, %v850, %v852
    %v857 = vsel %vm125, %v848, %v850
    %v858 = vsel %vm125, %v854, %v848
    %v859 = vmul.f32 %v858, %v130
    %v860 = vmul.f32 %v857, %v131
    %v861 = vmul.f32 %v856, %v132
    %v862 = vmul.f32 %v855, %v133
    %863 = vrot.lane.b32.xlu0 %v795, 127
    %v864 = vpop.permute.xlu0 %863
    %865 = vrot.lane.b32.xlu0 %v796, 127
    %v866 = vpop.permute.xlu0 %865
    %867 = vrot.lane.b32.xlu0 %v797, 127
    %v868 = vpop.permute.xlu0 %867
    %869 = vrot.lane.b32.xlu0 %v798, 127
    %v870 = vpop.permute.xlu0 %869
    %v871 = vsel %vm146, %v868, %v870
    %v872 = vsel %vm146, %v866, %v868
    %v873 = vsel %vm146, %v864, %v866
    %v874 = vsel %vm146, %v870, %v864
    %v875 = vmul.f32 %v873, %v151
    %v876 = vmul.f32 %v872, %v152
    %v877 = vmul.f32 %v871, %v153
    %v878 = vmul.f32 %v874, %v154
    %879 = vrot.lane.b32.xlu0 %v795, 113
    %v880 = vpop.permute.xlu0 %879
    %881 = vrot.lane.b32.xlu0 %v796, 113
    %v882 = vpop.permute.xlu0 %881
    %883 = vrot.lane.b32.xlu0 %v797, 113
    %v884 = vpop.permute.xlu0 %883
    %885 = vrot.lane.b32.xlu0 %v798, 113
    %v886 = vpop.permute.xlu0 %885
    %v887 = vsel %vm167, %v884, %v886
    %v888 = vsel %vm167, %v882, %v884
    %v889 = vsel %vm167, %v880, %v882
    %v890 = vsel %vm167, %v886, %v880
    %v891 = vmul.f32 %v889, %v172
    %v892 = vmul.f32 %v888, %v173
    %v893 = vmul.f32 %v887, %v174
    %v894 = vmul.f32 %v890, %v175
    %895 = vrot.lane.b32.xlu0 %v795, 112
    %v896 = vpop.permute.xlu0 %895
    %897 = vrot.lane.b32.xlu0 %v796, 112
    %v898 = vpop.permute.xlu0 %897
    %899 = vrot.lane.b32.xlu0 %v797, 112
    %v900 = vpop.permute.xlu0 %899
    %901 = vrot.lane.b32.xlu0 %v798, 112
    %v902 = vpop.permute.xlu0 %901
    %v903 = vsel %vm188, %v900, %v902
    %v904 = vsel %vm188, %v898, %v900
    %v905 = vsel %vm188, %v896, %v898
    %v906 = vsel %vm188, %v902, %v896
    %v907 = vmul.f32 %v905, %v193
    %v908 = vmul.f32 %v904, %v194
    %v909 = vmul.f32 %v903, %v195
    %v910 = vmul.f32 %v906, %v196
    %911 = vrot.lane.b32.xlu0 %v795, 111
    %v912 = vpop.permute.xlu0 %911
    %913 = vrot.lane.b32.xlu0 %v796, 111
    %v914 = vpop.permute.xlu0 %913
    %915 = vrot.lane.b32.xlu0 %v797, 111
    %v916 = vpop.permute.xlu0 %915
    %917 = vrot.lane.b32.xlu0 %v798, 111
    %v918 = vpop.permute.xlu0 %917
    %v919 = vsel %vm209, %v916, %v918
    %v920 = vsel %vm209, %v914, %v916
    %v921 = vsel %vm209, %v912, %v914
    %v922 = vsel %vm209, %v918, %v912
    %v923 = vmul.f32 %v921, %v214
    %v924 = vmul.f32 %v920, %v215
    %v925 = vmul.f32 %v919, %v216
    %v926 = vmul.f32 %v922, %v217
    %s927 = scalar_lea.vmem %s2, 24
    %v928 = vld [vmem:[%s927] sm:$0xff]
    %v930 = vsel %vm223, %v928, 0
    %932 = vmatpush.msra.mxu0 0.0
    %933 = vmatpush.msra.mxu0 0.0
    %934 = vmatpush.msra.mxu0 0.0
    %935 = vmatpush.msra.mxu0 0.0
    %936 = vmatpush.msra.mxu0 0.0
    %937 = vmatpush.msra.mxu0 0.0
    %938 = vmatpush.msra.mxu0 0.0
    %939 = vmatpush.msra.mxu0 %v923
    %940 = vmatpush.msra.mxu0 %v907
    %941 = vmatpush.msra.mxu0 %v891
    %942 = vmatpush.msra.mxu0 %v875
    %943 = vmatpush.msra.mxu0 %v795
    %944 = vmatpush.msra.mxu0 %v859
    %945 = vmatpush.msra.mxu0 %v843
    %946 = vmatpush.msra.mxu0 %v827
    %947 = vmatpush.msra.mxu0 %v811
    %948 = vmatmul.f32.gmra.mxu0 %v930
    %v949 = vpop.f32.mrf.mxu0
    %v950 = vadd.f32 0.0, %v949
    %951 = vdwg.mxu0
    %952 = vmatpush.msra.mxu0 0.0
    %953 = vmatpush.msra.mxu0 0.0
    %954 = vmatpush.msra.mxu0 0.0
    %955 = vmatpush.msra.mxu0 0.0
    %956 = vmatpush.msra.mxu0 0.0
    %957 = vmatpush.msra.mxu0 0.0
    %958 = vmatpush.msra.mxu0 0.0
    %959 = vmatpush.msra.mxu0 %v924
    %960 = vmatpush.msra.mxu0 %v908
    %961 = vmatpush.msra.mxu0 %v892
    %962 = vmatpush.msra.mxu0 %v876
    %963 = vmatpush.msra.mxu0 %v796
    %964 = vmatpush.msra.mxu0 %v860
    %965 = vmatpush.msra.mxu0 %v844
    %966 = vmatpush.msra.mxu0 %v828
    %967 = vmatpush.msra.mxu0 %v812
    %968 = vmatmul.f32.gmra.mxu0 %v930
    %v969 = vpop.f32.mrf.mxu0
    %v970 = vadd.f32 0.0, %v969
    %971 = vdwg.mxu0
    %972 = vmatpush.msra.mxu0 0.0
    %973 = vmatpush.msra.mxu0 0.0
    %974 = vmatpush.msra.mxu0 0.0
    %975 = vmatpush.msra.mxu0 0.0
    %976 = vmatpush.msra.mxu0 0.0
    %977 = vmatpush.msra.mxu0 0.0
    %978 = vmatpush.msra.mxu0 0.0
    %979 = vmatpush.msra.mxu0 %v925
    %980 = vmatpush.msra.mxu0 %v909
    %981 = vmatpush.msra.mxu0 %v893
    %982 = vmatpush.msra.mxu0 %v877
    %983 = vmatpush.msra.mxu0 %v797
    %984 = vmatpush.msra.mxu0 %v861
    %985 = vmatpush.msra.mxu0 %v845
    %986 = vmatpush.msra.mxu0 %v829
    %987 = vmatpush.msra.mxu0 %v813
    %988 = vmatmul.f32.gmra.mxu0 %v930
    %v989 = vpop.f32.mrf.mxu0
    %v990 = vadd.f32 0.0, %v989
    %991 = vdwg.mxu0
    %992 = vmatpush.msra.mxu0 0.0
    %993 = vmatpush.msra.mxu0 0.0
    %994 = vmatpush.msra.mxu0 0.0
    %995 = vmatpush.msra.mxu0 0.0
    %996 = vmatpush.msra.mxu0 0.0
    %997 = vmatpush.msra.mxu0 0.0
    %998 = vmatpush.msra.mxu0 0.0
    %999 = vmatpush.msra.mxu0 %v926
    %1000 = vmatpush.msra.mxu0 %v910
    %1001 = vmatpush.msra.mxu0 %v894
    %1002 = vmatpush.msra.mxu0 %v878
    %1003 = vmatpush.msra.mxu0 %v798
    %1004 = vmatpush.msra.mxu0 %v862
    %1005 = vmatpush.msra.mxu0 %v846
    %1006 = vmatpush.msra.mxu0 %v830
    %1007 = vmatpush.msra.mxu0 %v814
    %1008 = vmatmul.f32.gmra.mxu0 %v930
    %v1009 = vpop.f32.mrf.mxu0
    %v1010 = vadd.f32 0.0, %v1009
    %1011 = vdwg.mxu0
    %v1012 = vmax.f32 %v950, 0.0
    %v1013 = vmax.f32 %v970, 0.0
    %v1014 = vmax.f32 %v990, 0.0
    %v1015 = vmax.f32 %v1010, 0.0
    %s1016 = sld [smem:[#allocation2 + $0x4]]
    %v1017 = vstv %s1016
    %v1018 = vmul.f32 %v1012, %v1017
    %v1019 = vmul.f32 %v1013, %v1017
    %v1020 = vmul.f32 %v1014, %v1017
    %v1021 = vmul.f32 %v1015, %v1017
    %v1022 = vfloor.f32 %v1018
    %v1023 = vfloor.f32 %v1019
    %v1024 = vfloor.f32 %v1020
    %v1025 = vfloor.f32 %v1021
    %v1026 = vmax.f32 %v1022, -128.0
    %v1027 = vmax.f32 %v1023, -128.0
    %v1028 = vmax.f32 %v1024, -128.0
    %v1029 = vmax.f32 %v1025, -128.0
    %v1030 = vmin.f32 %v1026, 127.0
    %v1031 = vmin.f32 %v1027, 127.0
    %v1032 = vmin.f32 %v1028, 127.0
    %v1033 = vmin.f32 %v1029, 127.0
    %1034 = vrot.lane.b32.xlu0 %v1030, 17
    %v1035 = vpop.permute.xlu0 %1034
    %1036 = vrot.lane.b32.xlu0 %v1031, 17
    %v1037 = vpop.permute.xlu0 %1036
    %1038 = vrot.lane.b32.xlu0 %v1032, 17
    %v1039 = vpop.permute.xlu0 %1038
    %1040 = vrot.lane.b32.xlu0 %v1033, 17
    %v1041 = vpop.permute.xlu0 %1040
    %v1042 = vsel %vm62, %v1039, %v1041
    %v1043 = vsel %vm62, %v1037, %v1039
    %v1044 = vsel %vm62, %v1035, %v1037
    %v1045 = vsel %vm62, %v1041, %v1035
    %v1046 = vmul.f32 %v1045, %v67
    %v1047 = vmul.f32 %v1044, %v68
    %v1048 = vmul.f32 %v1043, %v69
    %v1049 = vmul.f32 %v1042, %v70
    %1050 = vrot.lane.b32.xlu0 %v1030, 16
    %v1051 = vpop.permute.xlu0 %1050
    %1052 = vrot.lane.b32.xlu0 %v1031, 16
    %v1053 = vpop.permute.xlu0 %1052
    %1054 = vrot.lane.b32.xlu0 %v1032, 16
    %v1055 = vpop.permute.xlu0 %1054
    %1056 = vrot.lane.b32.xlu0 %v1033, 16
    %v1057 = vpop.permute.xlu0 %1056
    %v1058 = vsel %vm83, %v1055, %v1057
    %v1059 = vsel %vm83, %v1053, %v1055
    %v1060 = vsel %vm83, %v1051, %v1053
    %v1061 = vsel %vm83, %v1057, %v1051
    %v1062 = vmul.f32 %v1061, %v88
    %v1063 = vmul.f32 %v1060, %v89
    %v1064 = vmul.f32 %v1059, %v90
    %v1065 = vmul.f32 %v1058, %v91
    %1066 = vrot.lane.b32.xlu0 %v1030, 15
    %v1067 = vpop.permute.xlu0 %1066
    %1068 = vrot.lane.b32.xlu0 %v1031, 15
    %v1069 = vpop.permute.xlu0 %1068
    %1070 = vrot.lane.b32.xlu0 %v1032, 15
    %v1071 = vpop.permute.xlu0 %1070
    %1072 = vrot.lane.b32.xlu0 %v1033, 15
    %v1073 = vpop.permute.xlu0 %1072
    %v1074 = vsel %vm104, %v1071, %v1073
    %v1075 = vsel %vm104, %v1069, %v1071
    %v1076 = vsel %vm104, %v1067, %v1069
    %v1077 = vsel %vm104, %v1073, %v1067
    %v1078 = vmul.f32 %v1077, %v109
    %v1079 = vmul.f32 %v1076, %v110
    %v1080 = vmul.f32 %v1075, %v111
    %v1081 = vmul.f32 %v1074, %v112
    %1082 = vrot.lane.b32.xlu0 %v1030, 1
    %v1083 = vpop.permute.xlu0 %1082
    %1084 = vrot.lane.b32.xlu0 %v1031, 1
    %v1085 = vpop.permute.xlu0 %1084
    %1086 = vrot.lane.b32.xlu0 %v1032, 1
    %v1087 = vpop.permute.xlu0 %1086
    %1088 = vrot.lane.b32.xlu0 %v1033, 1
    %v1089 = vpop.permute.xlu0 %1088
    %v1090 = vsel %vm125, %v1087, %v1089
    %v1091 = vsel %vm125, %v1085, %v1087
    %v1092 = vsel %vm125, %v1083, %v1085
    %v1093 = vsel %vm125, %v1089, %v1083
    %v1094 = vmul.f32 %v1093, %v130
    %v1095 = vmul.f32 %v1092, %v131
    %v1096 = vmul.f32 %v1091, %v132
    %v1097 = vmul.f32 %v1090, %v133
    %1098 = vrot.lane.b32.xlu0 %v1030, 127
    %v1099 = vpop.permute.xlu0 %1098
    %1100 = vrot.lane.b32.xlu0 %v1031, 127
    %v1101 = vpop.permute.xlu0 %1100
    %1102 = vrot.lane.b32.xlu0 %v1032, 127
    %v1103 = vpop.permute.xlu0 %1102
    %1104 = vrot.lane.b32.xlu0 %v1033, 127
    %v1105 = vpop.permute.xlu0 %1104
    %v1106 = vsel %vm146, %v1103, %v1105
    %v1107 = vsel %vm146, %v1101, %v1103
    %v1108 = vsel %vm146, %v1099, %v1101
    %v1109 = vsel %vm146, %v1105, %v1099
    %v1110 = vmul.f32 %v1108, %v151
    %v1111 = vmul.f32 %v1107, %v152
    %v1112 = vmul.f32 %v1106, %v153
    %v1113 = vmul.f32 %v1109, %v154
    %1114 = vrot.lane.b32.xlu0 %v1030, 113
    %v1115 = vpop.permute.xlu0 %1114
    %1116 = vrot.lane.b32.xlu0 %v1031, 113
    %v1117 = vpop.permute.xlu0 %1116
    %1118 = vrot.lane.b32.xlu0 %v1032, 113
    %v1119 = vpop.permute.xlu0 %1118
    %1120 = vrot.lane.b32.xlu0 %v1033, 113
    %v1121 = vpop.permute.xlu0 %1120
    %v1122 = vsel %vm167, %v1119, %v1121
    %v1123 = vsel %vm167, %v1117, %v1119
    %v1124 = vsel %vm167, %v1115, %v1117
    %v1125 = vsel %vm167, %v1121, %v1115
    %v1126 = vmul.f32 %v1124, %v172
    %v1127 = vmul.f32 %v1123, %v173
    %v1128 = vmul.f32 %v1122, %v174
    %v1129 = vmul.f32 %v1125, %v175
    %1130 = vrot.lane.b32.xlu0 %v1030, 112
    %v1131 = vpop.permute.xlu0 %1130
    %1132 = vrot.lane.b32.xlu0 %v1031, 112
    %v1133 = vpop.permute.xlu0 %1132
    %1134 = vrot.lane.b32.xlu0 %v1032, 112
    %v1135 = vpop.permute.xlu0 %1134
    %1136 = vrot.lane.b32.xlu0 %v1033, 112
    %v1137 = vpop.permute.xlu0 %1136
    %v1138 = vsel %vm188, %v1135, %v1137
    %v1139 = vsel %vm188, %v1133, %v1135
    %v1140 = vsel %vm188, %v1131, %v1133
    %v1141 = vsel %vm188, %v1137, %v1131
    %v1142 = vmul.f32 %v1140, %v193
    %v1143 = vmul.f32 %v1139, %v194
    %v1144 = vmul.f32 %v1138, %v195
    %v1145 = vmul.f32 %v1141, %v196
    %1146 = vrot.lane.b32.xlu0 %v1030, 111
    %v1147 = vpop.permute.xlu0 %1146
    %1148 = vrot.lane.b32.xlu0 %v1031, 111
    %v1149 = vpop.permute.xlu0 %1148
    %1150 = vrot.lane.b32.xlu0 %v1032, 111
    %v1151 = vpop.permute.xlu0 %1150
    %1152 = vrot.lane.b32.xlu0 %v1033, 111
    %v1153 = vpop.permute.xlu0 %1152
    %v1154 = vsel %vm209, %v1151, %v1153
    %v1155 = vsel %vm209, %v1149, %v1151
    %v1156 = vsel %vm209, %v1147, %v1149
    %v1157 = vsel %vm209, %v1153, %v1147
    %v1158 = vmul.f32 %v1156, %v214
    %v1159 = vmul.f32 %v1155, %v215
    %v1160 = vmul.f32 %v1154, %v216
    %v1161 = vmul.f32 %v1157, %v217
    %s1162 = scalar_lea.vmem %s2, 32
    %v1163 = vld [vmem:[%s1162] sm:$0xff]
    %v1165 = vsel %vm223, %v1163, 0
    %1167 = vmatpush.msra.mxu0 0.0
    %1168 = vmatpush.msra.mxu0 0.0
    %1169 = vmatpush.msra.mxu0 0.0
    %1170 = vmatpush.msra.mxu0 0.0
    %1171 = vmatpush.msra.mxu0 0.0
    %1172 = vmatpush.msra.mxu0 0.0
    %1173 = vmatpush.msra.mxu0 0.0
    %1174 = vmatpush.msra.mxu0 %v1158
    %1175 = vmatpush.msra.mxu0 %v1142
    %1176 = vmatpush.msra.mxu0 %v1126
    %1177 = vmatpush.msra.mxu0 %v1110
    %1178 = vmatpush.msra.mxu0 %v1030
    %1179 = vmatpush.msra.mxu0 %v1094
    %1180 = vmatpush.msra.mxu0 %v1078
    %1181 = vmatpush.msra.mxu0 %v1062
    %1182 = vmatpush.msra.mxu0 %v1046
    %1183 = vmatmul.f32.gmra.mxu0 %v1165
    %v1184 = vpop.f32.mrf.mxu0
    %v1185 = vadd.f32 0.0, %v1184
    %1186 = vdwg.mxu0
    %1187 = vmatpush.msra.mxu0 0.0
    %1188 = vmatpush.msra.mxu0 0.0
    %1189 = vmatpush.msra.mxu0 0.0
    %1190 = vmatpush.msra.mxu0 0.0
    %1191 = vmatpush.msra.mxu0 0.0
    %1192 = vmatpush.msra.mxu0 0.0
    %1193 = vmatpush.msra.mxu0 0.0
    %1194 = vmatpush.msra.mxu0 %v1159
    %1195 = vmatpush.msra.mxu0 %v1143
    %1196 = vmatpush.msra.mxu0 %v1127
    %1197 = vmatpush.msra.mxu0 %v1111
    %1198 = vmatpush.msra.mxu0 %v1031
    %1199 = vmatpush.msra.mxu0 %v1095
    %1200 = vmatpush.msra.mxu0 %v1079
    %1201 = vmatpush.msra.mxu0 %v1063
    %1202 = vmatpush.msra.mxu0 %v1047
    %1203 = vmatmul.f32.gmra.mxu0 %v1165
    %v1204 = vpop.f32.mrf.mxu0
    %v1205 = vadd.f32 0.0, %v1204
    %1206 = vdwg.mxu0
    %1207 = vmatpush.msra.mxu0 0.0
    %1208 = vmatpush.msra.mxu0 0.0
    %1209 = vmatpush.msra.mxu0 0.0
    %1210 = vmatpush.msra.mxu0 0.0
    %1211 = vmatpush.msra.mxu0 0.0
    %1212 = vmatpush.msra.mxu0 0.0
    %1213 = vmatpush.msra.mxu0 0.0
    %1214 = vmatpush.msra.mxu0 %v1160
    %1215 = vmatpush.msra.mxu0 %v1144
    %1216 = vmatpush.msra.mxu0 %v1128
    %1217 = vmatpush.msra.mxu0 %v1112
    %1218 = vmatpush.msra.mxu0 %v1032
    %1219 = vmatpush.msra.mxu0 %v1096
    %1220 = vmatpush.msra.mxu0 %v1080
    %1221 = vmatpush.msra.mxu0 %v1064
    %1222 = vmatpush.msra.mxu0 %v1048
    %1223 = vmatmul.f32.gmra.mxu0 %v1165
    %v1224 = vpop.f32.mrf.mxu0
    %v1225 = vadd.f32 0.0, %v1224
    %1226 = vdwg.mxu0
    %1227 = vmatpush.msra.mxu0 0.0
    %1228 = vmatpush.msra.mxu0 0.0
    %1229 = vmatpush.msra.mxu0 0.0
    %1230 = vmatpush.msra.mxu0 0.0
    %1231 = vmatpush.msra.mxu0 0.0
    %1232 = vmatpush.msra.mxu0 0.0
    %1233 = vmatpush.msra.mxu0 0.0
    %1234 = vmatpush.msra.mxu0 %v1161
    %1235 = vmatpush.msra.mxu0 %v1145
    %1236 = vmatpush.msra.mxu0 %v1129
    %1237 = vmatpush.msra.mxu0 %v1113
    %1238 = vmatpush.msra.mxu0 %v1033
    %1239 = vmatpush.msra.mxu0 %v1097
    %1240 = vmatpush.msra.mxu0 %v1081
    %1241 = vmatpush.msra.mxu0 %v1065
    %1242 = vmatpush.msra.mxu0 %v1049
    %1243 = vmatmul.f32.gmra.mxu0 %v1165
    %v1244 = vpop.f32.mrf.mxu0
    %v1245 = vadd.f32 0.0, %v1244
    %1246 = vdwg.mxu0
    %v1247 = vmax.f32 %v1185, 0.0
    %v1248 = vmax.f32 %v1205, 0.0
    %v1249 = vmax.f32 %v1225, 0.0
    %v1250 = vmax.f32 %v1245, 0.0
    %s1251 = sld [smem:[#allocation2 + $0x5]]
    %v1252 = vstv %s1251
    %v1253 = vmul.f32 %v1247, %v1252
    %v1254 = vmul.f32 %v1248, %v1252
    %v1255 = vmul.f32 %v1249, %v1252
    %v1256 = vmul.f32 %v1250, %v1252
    %v1257 = vfloor.f32 %v1253
    %v1258 = vfloor.f32 %v1254
    %v1259 = vfloor.f32 %v1255
    %v1260 = vfloor.f32 %v1256
    %v1261 = vmax.f32 %v1257, -128.0
    %v1262 = vmax.f32 %v1258, -128.0
    %v1263 = vmax.f32 %v1259, -128.0
    %v1264 = vmax.f32 %v1260, -128.0
    %v1265 = vmin.f32 %v1261, 127.0
    %v1266 = vmin.f32 %v1262, 127.0
    %v1267 = vmin.f32 %v1263, 127.0
    %v1268 = vmin.f32 %v1264, 127.0
    %1269 = vrot.lane.b32.xlu0 %v1265, 17
    %v1270 = vpop.permute.xlu0 %1269
    %1271 = vrot.lane.b32.xlu0 %v1266, 17
    %v1272 = vpop.permute.xlu0 %1271
    %1273 = vrot.lane.b32.xlu0 %v1267, 17
    %v1274 = vpop.permute.xlu0 %1273
    %1275 = vrot.lane.b32.xlu0 %v1268, 17
    %v1276 = vpop.permute.xlu0 %1275
    %v1277 = vsel %vm62, %v1274, %v1276
    %v1278 = vsel %vm62, %v1272, %v1274
    %v1279 = vsel %vm62, %v1270, %v1272
    %v1280 = vsel %vm62, %v1276, %v1270
    %v1281 = vmul.f32 %v1280, %v67
    %v1282 = vmul.f32 %v1279, %v68
    %v1283 = vmul.f32 %v1278, %v69
    %v1284 = vmul.f32 %v1277, %v70
    %1285 = vrot.lane.b32.xlu0 %v1265, 16
    %v1286 = vpop.permute.xlu0 %1285
    %1287 = vrot.lane.b32.xlu0 %v1266, 16
    %v1288 = vpop.permute.xlu0 %1287
    %1289 = vrot.lane.b32.xlu0 %v1267, 16
    %v1290 = vpop.permute.xlu0 %1289
    %1291 = vrot.lane.b32.xlu0 %v1268, 16
    %v1292 = vpop.permute.xlu0 %1291
    %v1293 = vsel %vm83, %v1290, %v1292
    %v1294 = vsel %vm83, %v1288, %v1290
    %v1295 = vsel %vm83, %v1286, %v1288
    %v1296 = vsel %vm83, %v1292, %v1286
    %v1297 = vmul.f32 %v1296, %v88
    %v1298 = vmul.f32 %v1295, %v89
    %v1299 = vmul.f32 %v1294, %v90
    %v1300 = vmul.f32 %v1293, %v91
    %1301 = vrot.lane.b32.xlu0 %v1265, 15
    %v1302 = vpop.permute.xlu0 %1301
    %1303 = vrot.lane.b32.xlu0 %v1266, 15
    %v1304 = vpop.permute.xlu0 %1303
    %1305 = vrot.lane.b32.xlu0 %v1267, 15
    %v1306 = vpop.permute.xlu0 %1305
    %1307 = vrot.lane.b32.xlu0 %v1268, 15
    %v1308 = vpop.permute.xlu0 %1307
    %v1309 = vsel %vm104, %v1306, %v1308
    %v1310 = vsel %vm104, %v1304, %v1306
    %v1311 = vsel %vm104, %v1302, %v1304
    %v1312 = vsel %vm104, %v1308, %v1302
    %v1313 = vmul.f32 %v1312, %v109
    %v1314 = vmul.f32 %v1311, %v110
    %v1315 = vmul.f32 %v1310, %v111
    %v1316 = vmul.f32 %v1309, %v112
    %1317 = vrot.lane.b32.xlu0 %v1265, 1
    %v1318 = vpop.permute.xlu0 %1317
    %1319 = vrot.lane.b32.xlu0 %v1266, 1
    %v1320 = vpop.permute.xlu0 %1319
    %1321 = vrot.lane.b32.xlu0 %v1267, 1
    %v1322 = vpop.permute.xlu0 %1321
    %1323 = vrot.lane.b32.xlu0 %v1268, 1
    %v1324 = vpop.permute.xlu0 %1323
    %v1325 = vsel %vm125, %v1322, %v1324
    %v1326 = vsel %vm125, %v1320, %v1322
    %v1327 = vsel %vm125, %v1318, %v1320
    %v1328 = vsel %vm125, %v1324, %v1318
    %v1329 = vmul.f32 %v1328, %v130
    %v1330 = vmul.f32 %v1327, %v131
    %v1331 = vmul.f32 %v1326, %v132
    %v1332 = vmul.f32 %v1325, %v133
    %1333 = vrot.lane.b32.xlu0 %v1265, 127
    %v1334 = vpop.permute.xlu0 %1333
    %1335 = vrot.lane.b32.xlu0 %v1266, 127
    %v1336 = vpop.permute.xlu0 %1335
    %1337 = vrot.lane.b32.xlu0 %v1267, 127
    %v1338 = vpop.permute.xlu0 %1337
    %1339 = vrot.lane.b32.xlu0 %v1268, 127
    %v1340 = vpop.permute.xlu0 %1339
    %v1341 = vsel %vm146, %v1338, %v1340
    %v1342 = vsel %vm146, %v1336, %v1338
    %v1343 = vsel %vm146, %v1334, %v1336
    %v1344 = vsel %vm146, %v1340, %v1334
    %v1345 = vmul.f32 %v1343, %v151
    %v1346 = vmul.f32 %v1342, %v152
    %v1347 = vmul.f32 %v1341, %v153
    %v1348 = vmul.f32 %v1344, %v154
    %1349 = vrot.lane.b32.xlu0 %v1265, 113
    %v1350 = vpop.permute.xlu0 %1349
    %1351 = vrot.lane.b32.xlu0 %v1266, 113
    %v1352 = vpop.permute.xlu0 %1351
    %1353 = vrot.lane.b32.xlu0 %v1267, 113
    %v1354 = vpop.permute.xlu0 %1353
    %1355 = vrot.lane.b32.xlu0 %v1268, 113
    %v1356 = vpop.permute.xlu0 %1355
    %v1357 = vsel %vm167, %v1354, %v1356
    %v1358 = vsel %vm167, %v1352, %v1354
    %v1359 = vsel %vm167, %v1350, %v1352
    %v1360 = vsel %vm167, %v1356, %v1350
    %v1361 = vmul.f32 %v1359, %v172
    %v1362 = vmul.f32 %v1358, %v173
    %v1363 = vmul.f32 %v1357, %v174
    %v1364 = vmul.f32 %v1360, %v175
    %1365 = vrot.lane.b32.xlu0 %v1265, 112
    %v1366 = vpop.permute.xlu0 %1365
    %1367 = vrot.lane.b32.xlu0 %v1266, 112
    %v1368 = vpop.permute.xlu0 %1367
    %1369 = vrot.lane.b32.xlu0 %v1267, 112
    %v1370 = vpop.permute.xlu0 %1369
    %1371 = vrot.lane.b32.xlu0 %v1268, 112
    %v1372 = vpop.permute.xlu0 %1371
    %v1373 = vsel %vm188, %v1370, %v1372
    %v1374 = vsel %vm188, %v1368, %v1370
    %v1375 = vsel %vm188, %v1366, %v1368
    %v1376 = vsel %vm188, %v1372, %v1366
    %v1377 = vmul.f32 %v1375, %v193
    %v1378 = vmul.f32 %v1374, %v194
    %v1379 = vmul.f32 %v1373, %v195
    %v1380 = vmul.f32 %v1376, %v196
    %1381 = vrot.lane.b32.xlu0 %v1265, 111
    %v1382 = vpop.permute.xlu0 %1381
    %1383 = vrot.lane.b32.xlu0 %v1266, 111
    %v1384 = vpop.permute.xlu0 %1383
    %1385 = vrot.lane.b32.xlu0 %v1267, 111
    %v1386 = vpop.permute.xlu0 %1385
    %1387 = vrot.lane.b32.xlu0 %v1268, 111
    %v1388 = vpop.permute.xlu0 %1387
    %v1389 = vsel %vm209, %v1386, %v1388
    %v1390 = vsel %vm209, %v1384, %v1386
    %v1391 = vsel %vm209, %v1382, %v1384
    %v1392 = vsel %vm209, %v1388, %v1382
    %v1393 = vmul.f32 %v1391, %v214
    %v1394 = vmul.f32 %v1390, %v215
    %v1395 = vmul.f32 %v1389, %v216
    %v1396 = vmul.f32 %v1392, %v217
    %s1397 = scalar_lea.vmem %s2, 40
    %v1398 = vld [vmem:[%s1397] sm:$0xff]
    %v1400 = vsel %vm223, %v1398, 0
    %1402 = vmatpush.msra.mxu0 0.0
    %1403 = vmatpush.msra.mxu0 0.0
    %1404 = vmatpush.msra.mxu0 0.0
    %1405 = vmatpush.msra.mxu0 0.0
    %1406 = vmatpush.msra.mxu0 0.0
    %1407 = vmatpush.msra.mxu0 0.0
    %1408 = vmatpush.msra.mxu0 0.0
    %1409 = vmatpush.msra.mxu0 %v1393
    %1410 = vmatpush.msra.mxu0 %v1377
    %1411 = vmatpush.msra.mxu0 %v1361
    %1412 = vmatpush.msra.mxu0 %v1345
    %1413 = vmatpush.msra.mxu0 %v1265
    %1414 = vmatpush.msra.mxu0 %v1329
    %1415 = vmatpush.msra.mxu0 %v1313
    %1416 = vmatpush.msra.mxu0 %v1297
    %1417 = vmatpush.msra.mxu0 %v1281
    %1418 = vmatmul.f32.gmra.mxu0 %v1400
    %v1419 = vpop.f32.mrf.mxu0
    %v1420 = vadd.f32 0.0, %v1419
    %1421 = vdwg.mxu0
    %1422 = vmatpush.msra.mxu0 0.0
    %1423 = vmatpush.msra.mxu0 0.0
    %1424 = vmatpush.msra.mxu0 0.0
    %1425 = vmatpush.msra.mxu0 0.0
    %1426 = vmatpush.msra.mxu0 0.0
    %1427 = vmatpush.msra.mxu0 0.0
    %1428 = vmatpush.msra.mxu0 0.0
    %1429 = vmatpush.msra.mxu0 %v1394
    %1430 = vmatpush.msra.mxu0 %v1378
    %1431 = vmatpush.msra.mxu0 %v1362
    %1432 = vmatpush.msra.mxu0 %v1346
    %1433 = vmatpush.msra.mxu0 %v1266
    %1434 = vmatpush.msra.mxu0 %v1330
    %1435 = vmatpush.msra.mxu0 %v1314
    %1436 = vmatpush.msra.mxu0 %v1298
    %1437 = vmatpush.msra.mxu0 %v1282
    %1438 = vmatmul.f32.gmra.mxu0 %v1400
    %v1439 = vpop.f32.mrf.mxu0
    %v1440 = vadd.f32 0.0, %v1439
    %1441 = vdwg.mxu0
    %1442 = vmatpush.msra.mxu0 0.0
    %1443 = vmatpush.msra.mxu0 0.0
    %1444 = vmatpush.msra.mxu0 0.0
    %1445 = vmatpush.msra.mxu0 0.0
    %1446 = vmatpush.msra.mxu0 0.0
    %1447 = vmatpush.msra.mxu0 0.0
    %1448 = vmatpush.msra.mxu0 0.0
    %1449 = vmatpush.msra.mxu0 %v1395
    %1450 = vmatpush.msra.mxu0 %v1379
    %1451 = vmatpush.msra.mxu0 %v1363
    %1452 = vmatpush.msra.mxu0 %v1347
    %1453 = vmatpush.msra.mxu0 %v1267
    %1454 = vmatpush.msra.mxu0 %v1331
    %1455 = vmatpush.msra.mxu0 %v1315
    %1456 = vmatpush.msra.mxu0 %v1299
    %1457 = vmatpush.msra.mxu0 %v1283
    %1458 = vmatmul.f32.gmra.mxu0 %v1400
    %v1459 = vpop.f32.mrf.mxu0
    %v1460 = vadd.f32 0.0, %v1459
    %1461 = vdwg.mxu0
    %1462 = vmatpush.msra.mxu0 0.0
    %1463 = vmatpush.msra.mxu0 0.0
    %1464 = vmatpush.msra.mxu0 0.0
    %1465 = vmatpush.msra.mxu0 0.0
    %1466 = vmatpush.msra.mxu0 0.0
    %1467 = vmatpush.msra.mxu0 0.0
    %1468 = vmatpush.msra.mxu0 0.0
    %1469 = vmatpush.msra.mxu0 %v1396
    %1470 = vmatpush.msra.mxu0 %v1380
    %1471 = vmatpush.msra.mxu0 %v1364
    %1472 = vmatpush.msra.mxu0 %v1348
    %1473 = vmatpush.msra.mxu0 %v1268
    %1474 = vmatpush.msra.mxu0 %v1332
    %1475 = vmatpush.msra.mxu0 %v1316
    %1476 = vmatpush.msra.mxu0 %v1300
    %1477 = vmatpush.msra.mxu0 %v1284
    %1478 = vmatmul.f32.gmra.mxu0 %v1400
    %v1479 = vpop.f32.mrf.mxu0
    %v1480 = vadd.f32 0.0, %v1479
    %1481 = vdwg.mxu0
    %v1482 = vmax.f32 %v1420, 0.0
    %v1483 = vmax.f32 %v1440, 0.0
    %v1484 = vmax.f32 %v1460, 0.0
    %v1485 = vmax.f32 %v1480, 0.0
    %s1486 = sld [smem:[#allocation2 + $0x6]]
    %v1487 = vstv %s1486
    %v1488 = vmul.f32 %v1482, %v1487
    %v1489 = vmul.f32 %v1483, %v1487
    %v1490 = vmul.f32 %v1484, %v1487
    %v1491 = vmul.f32 %v1485, %v1487
    %v1492 = vfloor.f32 %v1488
    %v1493 = vfloor.f32 %v1489
    %v1494 = vfloor.f32 %v1490
    %v1495 = vfloor.f32 %v1491
    %v1496 = vmax.f32 %v1492, -128.0
    %v1497 = vmax.f32 %v1493, -128.0
    %v1498 = vmax.f32 %v1494, -128.0
    %v1499 = vmax.f32 %v1495, -128.0
    %v1500 = vmin.f32 %v1496, 127.0
    %v1501 = vmin.f32 %v1497, 127.0
    %v1502 = vmin.f32 %v1498, 127.0
    %v1503 = vmin.f32 %v1499, 127.0
    %1504 = vrot.lane.b32.xlu0 %v1500, 17
    %v1505 = vpop.permute.xlu0 %1504
    %1506 = vrot.lane.b32.xlu0 %v1501, 17
    %v1507 = vpop.permute.xlu0 %1506
    %1508 = vrot.lane.b32.xlu0 %v1502, 17
    %v1509 = vpop.permute.xlu0 %1508
    %1510 = vrot.lane.b32.xlu0 %v1503, 17
    %v1511 = vpop.permute.xlu0 %1510
    %v1512 = vsel %vm62, %v1509, %v1511
    %v1513 = vsel %vm62, %v1507, %v1509
    %v1514 = vsel %vm62, %v1505, %v1507
    %v1515 = vsel %vm62, %v1511, %v1505
    %v1516 = vmul.f32 %v1515, %v67
    %v1517 = vmul.f32 %v1514, %v68
    %v1518 = vmul.f32 %v1513, %v69
    %v1519 = vmul.f32 %v1512, %v70
    %1520 = vrot.lane.b32.xlu0 %v1500, 16
    %v1521 = vpop.permute.xlu0 %1520
    %1522 = vrot.lane.b32.xlu0 %v1501, 16
    %v1523 = vpop.permute.xlu0 %1522
    %1524 = vrot.lane.b32.xlu0 %v1502, 16
    %v1525 = vpop.permute.xlu0 %1524
    %1526 = vrot.lane.b32.xlu0 %v1503, 16
    %v1527 = vpop.permute.xlu0 %1526
    %v1528 = vsel %vm83, %v1525, %v1527
    %v1529 = vsel %vm83, %v1523, %v1525
    %v1530 = vsel %vm83, %v1521, %v1523
    %v1531 = vsel %vm83, %v1527, %v1521
    %v1532 = vmul.f32 %v1531, %v88
    %v1533 = vmul.f32 %v1530, %v89
    %v1534 = vmul.f32 %v1529, %v90
    %v1535 = vmul.f32 %v1528, %v91
    %1536 = vrot.lane.b32.xlu0 %v1500, 15
    %v1537 = vpop.permute.xlu0 %1536
    %1538 = vrot.lane.b32.xlu0 %v1501, 15
    %v1539 = vpop.permute.xlu0 %1538
    %1540 = vrot.lane.b32.xlu0 %v1502, 15
    %v1541 = vpop.permute.xlu0 %1540
    %1542 = vrot.lane.b32.xlu0 %v1503, 15
    %v1543 = vpop.permute.xlu0 %1542
    %v1544 = vsel %vm104, %v1541, %v1543
    %v1545 = vsel %vm104, %v1539, %v1541
    %v1546 = vsel %vm104, %v1537, %v1539
    %v1547 = vsel %vm104, %v1543, %v1537
    %v1548 = vmul.f32 %v1547, %v109
    %v1549 = vmul.f32 %v1546, %v110
    %v1550 = vmul.f32 %v1545, %v111
    %v1551 = vmul.f32 %v1544, %v112
    %1552 = vrot.lane.b32.xlu0 %v1500, 1
    %v1553 = vpop.permute.xlu0 %1552
    %1554 = vrot.lane.b32.xlu0 %v1501, 1
    %v1555 = vpop.permute.xlu0 %1554
    %1556 = vrot.lane.b32.xlu0 %v1502, 1
    %v1557 = vpop.permute.xlu0 %1556
    %1558 = vrot.lane.b32.xlu0 %v1503, 1
    %v1559 = vpop.permute.xlu0 %1558
    %v1560 = vsel %vm125, %v1557, %v1559
    %v1561 = vsel %vm125, %v1555, %v1557
    %v1562 = vsel %vm125, %v1553, %v1555
    %v1563 = vsel %vm125, %v1559, %v1553
    %v1564 = vmul.f32 %v1563, %v130
    %v1565 = vmul.f32 %v1562, %v131
    %v1566 = vmul.f32 %v1561, %v132
    %v1567 = vmul.f32 %v1560, %v133
    %1568 = vrot.lane.b32.xlu0 %v1500, 127
    %v1569 = vpop.permute.xlu0 %1568
    %1570 = vrot.lane.b32.xlu0 %v1501, 127
    %v1571 = vpop.permute.xlu0 %1570
    %1572 = vrot.lane.b32.xlu0 %v1502, 127
    %v1573 = vpop.permute.xlu0 %1572
    %1574 = vrot.lane.b32.xlu0 %v1503, 127
    %v1575 = vpop.permute.xlu0 %1574
    %v1576 = vsel %vm146, %v1573, %v1575
    %v1577 = vsel %vm146, %v1571, %v1573
    %v1578 = vsel %vm146, %v1569, %v1571
    %v1579 = vsel %vm146, %v1575, %v1569
    %v1580 = vmul.f32 %v1578, %v151
    %v1581 = vmul.f32 %v1577, %v152
    %v1582 = vmul.f32 %v1576, %v153
    %v1583 = vmul.f32 %v1579, %v154
    %1584 = vrot.lane.b32.xlu0 %v1500, 113
    %v1585 = vpop.permute.xlu0 %1584
    %1586 = vrot.lane.b32.xlu0 %v1501, 113
    %v1587 = vpop.permute.xlu0 %1586
    %1588 = vrot.lane.b32.xlu0 %v1502, 113
    %v1589 = vpop.permute.xlu0 %1588
    %1590 = vrot.lane.b32.xlu0 %v1503, 113
    %v1591 = vpop.permute.xlu0 %1590
    %v1592 = vsel %vm167, %v1589, %v1591
    %v1593 = vsel %vm167, %v1587, %v1589
    %v1594 = vsel %vm167, %v1585, %v1587
    %v1595 = vsel %vm167, %v1591, %v1585
    %v1596 = vmul.f32 %v1594, %v172
    %v1597 = vmul.f32 %v1593, %v173
    %v1598 = vmul.f32 %v1592, %v174
    %v1599 = vmul.f32 %v1595, %v175
    %1600 = vrot.lane.b32.xlu0 %v1500, 112
    %v1601 = vpop.permute.xlu0 %1600
    %1602 = vrot.lane.b32.xlu0 %v1501, 112
    %v1603 = vpop.permute.xlu0 %1602
    %1604 = vrot.lane.b32.xlu0 %v1502, 112
    %v1605 = vpop.permute.xlu0 %1604
    %1606 = vrot.lane.b32.xlu0 %v1503, 112
    %v1607 = vpop.permute.xlu0 %1606
    %v1608 = vsel %vm188, %v1605, %v1607
    %v1609 = vsel %vm188, %v1603, %v1605
    %v1610 = vsel %vm188, %v1601, %v1603
    %v1611 = vsel %vm188, %v1607, %v1601
    %v1612 = vmul.f32 %v1610, %v193
    %v1613 = vmul.f32 %v1609, %v194
    %v1614 = vmul.f32 %v1608, %v195
    %v1615 = vmul.f32 %v1611, %v196
    %1616 = vrot.lane.b32.xlu0 %v1500, 111
    %v1617 = vpop.permute.xlu0 %1616
    %1618 = vrot.lane.b32.xlu0 %v1501, 111
    %v1619 = vpop.permute.xlu0 %1618
    %1620 = vrot.lane.b32.xlu0 %v1502, 111
    %v1621 = vpop.permute.xlu0 %1620
    %1622 = vrot.lane.b32.xlu0 %v1503, 111
    %v1623 = vpop.permute.xlu0 %1622
    %v1624 = vsel %vm209, %v1621, %v1623
    %v1625 = vsel %vm209, %v1619, %v1621
    %v1626 = vsel %vm209, %v1617, %v1619
    %v1627 = vsel %vm209, %v1623, %v1617
    %v1628 = vmul.f32 %v1626, %v214
    %v1629 = vmul.f32 %v1625, %v215
    %v1630 = vmul.f32 %v1624, %v216
    %v1631 = vmul.f32 %v1627, %v217
    %s1632 = scalar_lea.vmem %s2, 48
    %v1633 = vld [vmem:[%s1632] sm:$0xff]
    %v1635 = vsel %vm223, %v1633, 0
    %1637 = vmatpush.msra.mxu0 0.0
    %1638 = vmatpush.msra.mxu0 0.0
    %1639 = vmatpush.msra.mxu0 0.0
    %1640 = vmatpush.msra.mxu0 0.0
    %1641 = vmatpush.msra.mxu0 0.0
    %1642 = vmatpush.msra.mxu0 0.0
    %1643 = vmatpush.msra.mxu0 0.0
    %1644 = vmatpush.msra.mxu0 %v1628
    %1645 = vmatpush.msra.mxu0 %v1612
    %1646 = vmatpush.msra.mxu0 %v1596
    %1647 = vmatpush.msra.mxu0 %v1580
    %1648 = vmatpush.msra.mxu0 %v1500
    %1649 = vmatpush.msra.mxu0 %v1564
    %1650 = vmatpush.msra.mxu0 %v1548
    %1651 = vmatpush.msra.mxu0 %v1532
    %1652 = vmatpush.msra.mxu0 %v1516
    %1653 = vmatmul.f32.gmra.mxu0 %v1635
    %v1654 = vpop.f32.mrf.mxu0
    %v1655 = vadd.f32 0.0, %v1654
    %1656 = vdwg.mxu0
    %1657 = vmatpush.msra.mxu0 0.0
    %1658 = vmatpush.msra.mxu0 0.0
    %1659 = vmatpush.msra.mxu0 0.0
    %1660 = vmatpush.msra.mxu0 0.0
    %1661 = vmatpush.msra.mxu0 0.0
    %1662 = vmatpush.msra.mxu0 0.0
    %1663 = vmatpush.msra.mxu0 0.0
    %1664 = vmatpush.msra.mxu0 %v1629
    %1665 = vmatpush.msra.mxu0 %v1613
    %1666 = vmatpush.msra.mxu0 %v1597
    %1667 = vmatpush.msra.mxu0 %v1581
    %1668 = vmatpush.msra.mxu0 %v1501
    %1669 = vmatpush.msra.mxu0 %v1565
    %1670 = vmatpush.msra.mxu0 %v1549
    %1671 = vmatpush.msra.mxu0 %v1533
    %1672 = vmatpush.msra.mxu0 %v1517
    %1673 = vmatmul.f32.gmra.mxu0 %v1635
    %v1674 = vpop.f32.mrf.mxu0
    %v1675 = vadd.f32 0.0, %v1674
    %1676 = vdwg.mxu0
    %1677 = vmatpush.msra.mxu0 0.0
    %1678 = vmatpush.msra.mxu0 0.0
    %1679 = vmatpush.msra.mxu0 0.0
    %1680 = vmatpush.msra.mxu0 0.0
    %1681 = vmatpush.msra.mxu0 0.0
    %1682 = vmatpush.msra.mxu0 0.0
    %1683 = vmatpush.msra.mxu0 0.0
    %1684 = vmatpush.msra.mxu0 %v1630
    %1685 = vmatpush.msra.mxu0 %v1614
    %1686 = vmatpush.msra.mxu0 %v1598
    %1687 = vmatpush.msra.mxu0 %v1582
    %1688 = vmatpush.msra.mxu0 %v1502
    %1689 = vmatpush.msra.mxu0 %v1566
    %1690 = vmatpush.msra.mxu0 %v1550
    %1691 = vmatpush.msra.mxu0 %v1534
    %1692 = vmatpush.msra.mxu0 %v1518
    %1693 = vmatmul.f32.gmra.mxu0 %v1635
    %v1694 = vpop.f32.mrf.mxu0
    %v1695 = vadd.f32 0.0, %v1694
    %1696 = vdwg.mxu0
    %1697 = vmatpush.msra.mxu0 0.0
    %1698 = vmatpush.msra.mxu0 0.0
    %1699 = vmatpush.msra.mxu0 0.0
    %1700 = vmatpush.msra.mxu0 0.0
    %1701 = vmatpush.msra.mxu0 0.0
    %1702 = vmatpush.msra.mxu0 0.0
    %1703 = vmatpush.msra.mxu0 0.0
    %1704 = vmatpush.msra.mxu0 %v1631
    %1705 = vmatpush.msra.mxu0 %v1615
    %1706 = vmatpush.msra.mxu0 %v1599
    %1707 = vmatpush.msra.mxu0 %v1583
    %1708 = vmatpush.msra.mxu0 %v1503
    %1709 = vmatpush.msra.mxu0 %v1567
    %1710 = vmatpush.msra.mxu0 %v1551
    %1711 = vmatpush.msra.mxu0 %v1535
    %1712 = vmatpush.msra.mxu0 %v1519
    %1713 = vmatmul.f32.gmra.mxu0 %v1635
    %v1714 = vpop.f32.mrf.mxu0
    %v1715 = vadd.f32 0.0, %v1714
    %1716 = vdwg.mxu0
    %s1717 = sld [smem:[#allocation2 + $0x7]]
    %v1718 = vstv %s1717
    %v1719 = vmul.f32 %v1655, %v1718
    %v1720 = vmul.f32 %v1675, %v1718
    %v1721 = vmul.f32 %v1695, %v1718
    %v1722 = vmul.f32 %v1715, %v1718
    %v1723 = vfloor.f32 %v1719
    %v1724 = vfloor.f32 %v1720
    %v1725 = vfloor.f32 %v1721
    %v1726 = vfloor.f32 %v1722
    %v1727 = vmax.f32 %v1723, -128.0
    %v1728 = vmax.f32 %v1724, -128.0
    %v1729 = vmax.f32 %v1725, -128.0
    %v1730 = vmax.f32 %v1726, -128.0
    %v1731 = vmin.f32 %v1727, 127.0
    %v1732 = vmin.f32 %v1728, 127.0
    %v1733 = vmin.f32 %v1729, 127.0
    %v1734 = vmin.f32 %v1730, 127.0
    %v1739 = vrot.slane %v1732, 4
    %v1740 = vrot.slane %v1734, 4
    %vm1741 = vcmask 1043456
    %v1742 = vsel %vm1741, %v1731, %v1739
    %v1743 = vsel %vm1741, %v1733, %v1740
    %1746 = vst [vmem:[%s4] sm:$0xff] %v1742
    %1747 = vst [vmem:[%s4 + $0x8] sm:$0xff] %v1743
    // Predicated region
    $region22: #{net_quantized_forward.1} parent=1 // pred_check
      _
    $region23: #{net_quantized_forward.1} parent=1 // pred_check_branch
      %1749 = sbr.rel (0) target = $region25
    $region24: #{net_quantized_forward.1} parent=1 // pred_region
      _
    $region25: #{net_quantized_forward.1} parent=1 // pred_fallthru
      _
    // Predicated region
    $region26: #{net_quantized_forward.1} parent=1 // pred_check
      _
    $region27: #{net_quantized_forward.1} parent=1 // pred_check_branch
      %1751 = sbr.rel (0) target = $region29
    $region28: #{net_quantized_forward.1} parent=1 // pred_region
      _
    $region29: #{net_quantized_forward.1} parent=1 // pred_fallthru
      _
    %1752 = vsyncpa [#allocation3], 1

</llo_original>
